<compile_context>
chip_gen: v7x
topology: tpu7x:2x2x1
jax: 0.10.0
libtpu: 0.0.40
codegen_flags: <defaults>
</compile_context>

<pallas_src>
import math
import jax
import jax.numpy as jnp
from jax import lax
from jax.experimental import pallas as pl
from jax.experimental.pallas import tpu as pltpu  # noqa: F401  (TPU backend assumed)

# ---- config (small, consistent with the module) ----
B = 2          # batch
T = 8          # sequence length
C = 32         # n_embd
H = 4          # n_head
D = C // H     # head dim
EPS = 1e-5
_GELU_C = math.sqrt(2.0 / math.pi)


def _layernorm(x, g, b):
    # x: (R, C); g/b: (1, C)
    mu = jnp.mean(x, axis=-1, keepdims=True)
    var = jnp.mean((x - mu) ** 2, axis=-1, keepdims=True)
    return (x - mu) * lax.rsqrt(var + EPS) * g + b


def _gelu_tanh(x):
    # GELU(approximate='tanh')
    return 0.5 * x * (1.0 + jnp.tanh(_GELU_C * (x + 0.044715 * x * x * x)))


def block_kernel(x_ref, w_ref, pw_ref, mpw_ref, vec_ref, o_ref):
    # x_ref   : (B*T, C)   folded activations
    # w_ref   : (C, 256)   [ c_attn (96 cols, q-cols pre-scaled) | pad | c_fc (128 cols) ]
    # pw_ref  : (C, C)     attention out-projection
    # mpw_ref : (4C, C)    MLP c_proj
    # vec_ref : (8, 128)   rows: ln1_g, ln1_b, attn_b, proj_b, ln2_g, ln2_b, fc_b, mproj_b
    x = x_ref[...]                                  # (16, 32)

    ln1_g = vec_ref[0:1, :C]
    ln1_b = vec_ref[1:2, :C]
    attn_b = vec_ref[2:3, :3 * C]
    proj_b = vec_ref[3:4, :C]
    ln2_g = vec_ref[4:5, :C]
    ln2_b = vec_ref[5:6, :C]
    fc_b = vec_ref[6:7, :]
    mproj_b = vec_ref[7:8, :C]

    attn_w = w_ref[:, 0:3 * C]                      # (32, 96)
    fc_w = w_ref[:, 128:128 + 4 * C]                # (32, 128)

    # ---------------- attention branch ----------------
    h1 = _layernorm(x, ln1_g, ln1_b)
    qkv = jnp.dot(h1, attn_w, preferred_element_type=jnp.float32) + attn_b   # (16, 96)
    q = qkv[:, 0 * C:1 * C]
    k = qkv[:, 1 * C:2 * C]
    v = qkv[:, 2 * C:3 * C]

    def to_heads(a):
        # (B*T, C) -> (H*B, T, D); leading index = h*B + b.
        # One lane-slice per head (both batches at once), free sublane-boundary
        # reshape, one 4-way leading-axis stack.
        return jnp.stack(
            [a[:, h * D:(h + 1) * D].reshape(B, T, D) for h in range(H)],
            axis=0).reshape(H * B, T, D)

    qs, ks, vs = to_heads(q), to_heads(k), to_heads(v)     # each (8, 8, 8)

    row = lax.broadcasted_iota(jnp.int32, (T, T), 0)   # query index
    col = lax.broadcasted_iota(jnp.int32, (T, T), 1)   # key index
    causal = (col <= row)[None, :, :]

    # 1/sqrt(D) is already folded into the q columns of c_attn (see wrapper).
    scores = lax.dot_general(qs, ks, (((2,), (2,)), ((0,), (0,))),
                             preferred_element_type=jnp.float32)             # (HB, T, T)
    scores = jnp.where(causal, scores, -1e30)
    scores = scores - jnp.max(scores, axis=-1, keepdims=True)
    e = jnp.exp(scores)
    p = e * pl.reciprocal(jnp.sum(e, axis=-1, keepdims=True), approx=True)

    yh = lax.dot_general(p, vs, (((2,), (1,)), ((0,), (0,))),
                         preferred_element_type=jnp.float32)                 # (HB, T, D)

    # Lane-pack heads back into a single (B*T, C) slab, then ONE out-projection matmul.
    y = jnp.concatenate(
        [yh[h * B:(h + 1) * B].reshape(B * T, D) for h in range(H)], axis=1)  # (16, 32)
    attn_out = jnp.dot(y, pw_ref[...],
                       preferred_element_type=jnp.float32) + proj_b           # (16, 32)

    x = x + attn_out                                # residual 1

    # ---------------- MLP branch ----------------
    h2 = _layernorm(x, ln2_g, ln2_b)
    hidden = jnp.dot(h2, fc_w, preferred_element_type=jnp.float32) + fc_b    # (16, 128)
    hidden = _gelu_tanh(hidden)
    mlp_out = jnp.dot(hidden, mpw_ref[...],
                      preferred_element_type=jnp.float32) + mproj_b          # (16, 32)

    o_ref[...] = x + mlp_out                        # residual 2


def gpt_block(x, params):
    (ln1_g, ln1_b, attn_w, attn_b, proj_w, proj_b,
     ln2_g, ln2_b, fc_w, fc_b, mproj_w, mproj_b) = params

    scale = 1.0 / math.sqrt(D)
    # Fold the attention score scale into the q columns of c_attn (free, outside kernel).
    attn_w_s = attn_w.at[:, :C].multiply(scale)
    attn_b_s = attn_b.at[:C].multiply(scale)

    # Packed, lane-dense weight slab: [c_attn (96) | pad to 128 | c_fc (128)] -> (32, 256)
    attn_w_pad = jnp.pad(attn_w_s, ((0, 0), (0, 128 - 3 * C)))
    big_w = jnp.concatenate([attn_w_pad, fc_w], axis=1)

    def _row(v):
        return jnp.pad(v, (0, 128 - v.shape[0]))[None, :]

    vecs = jnp.concatenate(
        [_row(ln1_g), _row(ln1_b), _row(attn_b_s), _row(proj_b),
         _row(ln2_g), _row(ln2_b), _row(fc_b), _row(mproj_b)], axis=0)       # (8, 128)

    x2 = x.reshape(B * T, C)                        # fold batch into rows

    out2 = pl.pallas_call(
        block_kernel,
        out_shape=jax.ShapeDtypeStruct((B * T, C), jnp.float32),
    )(x2, big_w, proj_w, mproj_w, vecs)
    return out2.reshape(B, T, C)


def init_params(key):
    ks = jax.random.split(key, 4)
    std = 0.02
    ln1_g = jnp.ones((C,), jnp.float32)
    ln1_b = jnp.zeros((C,), jnp.float32)
    attn_w = std * jax.random.normal(ks[0], (C, 3 * C), jnp.float32)
    attn_b = jnp.zeros((3 * C,), jnp.float32)
    proj_w = std * jax.random.normal(ks[1], (C, C), jnp.float32)
    proj_b = jnp.zeros((C,), jnp.float32)
    ln2_g = jnp.ones((C,), jnp.float32)
    ln2_b = jnp.zeros((C,), jnp.float32)
    fc_w = std * jax.random.normal(ks[2], (C, 4 * C), jnp.float32)
    fc_b = jnp.zeros((4 * C,), jnp.float32)
    mproj_w = std * jax.random.normal(ks[3], (4 * C, C), jnp.float32)
    mproj_b = jnp.zeros((C,), jnp.float32)
    return (ln1_g, ln1_b, attn_w, attn_b, proj_w, proj_b,
            ln2_g, ln2_b, fc_w, fc_b, mproj_w, mproj_b)


def reference_block(x, params):
    """Pure-JAX reference for sanity checking."""
    (ln1_g, ln1_b, attn_w, attn_b, proj_w, proj_b,
     ln2_g, ln2_b, fc_w, fc_b, mproj_w, mproj_b) = params

    def ln(x, g, b):
        mu = jnp.mean(x, axis=-1, keepdims=True)
        var = jnp.mean((x - mu) ** 2, axis=-1, keepdims=True)
        return (x - mu) / jnp.sqrt(var + EPS) * g + b

    h1 = ln(x, ln1_g, ln1_b)
    qkv = h1 @ attn_w + attn_b
    q, k, v = jnp.split(qkv, 3, axis=-1)
    q = q.reshape(B, T, H, D).transpose(0, 2, 1, 3)
    k = k.reshape(B, T, H, D).transpose(0, 2, 1, 3)
    v = v.reshape(B, T, H, D).transpose(0, 2, 1, 3)
    scores = jnp.einsum('bhqd,bhkd->bhqk', q, k) / math.sqrt(D)
    mask = jnp.tril(jnp.ones((T, T), bool))
    scores = jnp.where(mask, scores, -1e30)
    p = jax.nn.softmax(scores, axis=-1)
    y = jnp.einsum('bhqk,bhkd->bhqd', p, v)
    y = y.transpose(0, 2, 1, 3).reshape(B, T, C)
    x = x + y @ proj_w + proj_b

    h2 = ln(x, ln2_g, ln2_b)
    hidden = h2 @ fc_w + fc_b
    hidden = 0.5 * hidden * (1.0 + jnp.tanh(_GELU_C * (hidden + 0.044715 * hidden ** 3)))
    return x + hidden @ mproj_w + mproj_b


if __name__ == "__main__":
    key = jax.random.PRNGKey(0)
    kx, kp = jax.random.split(key)
    x = jax.random.normal(kx, (B, T, C), jnp.float32)
    params = init_params(kp)

    out = gpt_block(x, params)
    out = jax.block_until_ready(out)

    ref = reference_block(x, params)
    assert out.shape == (B, T, C)
    assert jnp.allclose(out, ref, atol=2e-4, rtol=2e-4), \
        f"max err {jnp.max(jnp.abs(out - ref))}"
    print("KERNEL_OK")
</pallas_src>

<mosaic_0001>
module attributes {stable_mosaic.version = 11 : i64} {
  func.func @block_kernel(%arg0: memref<16x32xf32, #tpu.memory_space<vmem>>, %arg1: memref<32x256xf32, #tpu.memory_space<vmem>>, %arg2: memref<32x32xf32, #tpu.memory_space<vmem>>, %arg3: memref<128x32xf32, #tpu.memory_space<vmem>>, %arg4: memref<8x128xf32, #tpu.memory_space<vmem>>, %arg5: memref<16x32xf32, #tpu.memory_space<vmem>>) attributes {dimension_semantics = [], scalar_prefetch = 0 : i64, scratch_operands = 0 : i64, tpu.core_type = #tpu.core_type<tc>} {
    %c0 = arith.constant 0 : index
    %c0_0 = arith.constant 0 : index
    %0 = vector.load %arg0[%c0, %c0_0] : memref<16x32xf32, #tpu.memory_space<vmem>>, vector<16x32xf32>
    %c0_1 = arith.constant 0 : index
    %c0_2 = arith.constant 0 : index
    %1 = vector.load %arg4[%c0_1, %c0_2] : memref<8x128xf32, #tpu.memory_space<vmem>>, vector<1x32xf32>
    %c1 = arith.constant 1 : index
    %c0_3 = arith.constant 0 : index
    %2 = vector.load %arg4[%c1, %c0_3] : memref<8x128xf32, #tpu.memory_space<vmem>>, vector<1x32xf32>
    %c2 = arith.constant 2 : index
    %c0_4 = arith.constant 0 : index
    %3 = vector.load %arg4[%c2, %c0_4] : memref<8x128xf32, #tpu.memory_space<vmem>>, vector<1x96xf32>
    %c3 = arith.constant 3 : index
    %c0_5 = arith.constant 0 : index
    %4 = vector.load %arg4[%c3, %c0_5] : memref<8x128xf32, #tpu.memory_space<vmem>>, vector<1x32xf32>
    %c4 = arith.constant 4 : index
    %c0_6 = arith.constant 0 : index
    %5 = vector.load %arg4[%c4, %c0_6] : memref<8x128xf32, #tpu.memory_space<vmem>>, vector<1x32xf32>
    %c5 = arith.constant 5 : index
    %c0_7 = arith.constant 0 : index
    %6 = vector.load %arg4[%c5, %c0_7] : memref<8x128xf32, #tpu.memory_space<vmem>>, vector<1x32xf32>
    %c6 = arith.constant 6 : index
    %c0_8 = arith.constant 0 : index
    %7 = vector.load %arg4[%c6, %c0_8] : memref<8x128xf32, #tpu.memory_space<vmem>>, vector<1x128xf32>
    %c7 = arith.constant 7 : index
    %c0_9 = arith.constant 0 : index
    %8 = vector.load %arg4[%c7, %c0_9] : memref<8x128xf32, #tpu.memory_space<vmem>>, vector<1x32xf32>
    %c0_10 = arith.constant 0 : index
    %c0_11 = arith.constant 0 : index
    %9 = vector.load %arg1[%c0_10, %c0_11] : memref<32x256xf32, #tpu.memory_space<vmem>>, vector<32x96xf32>
    %c0_12 = arith.constant 0 : index
    %c128 = arith.constant 128 : index
    %10 = vector.load %arg1[%c0_12, %c128] : memref<32x256xf32, #tpu.memory_space<vmem>>, vector<32x128xf32>
    %cst = arith.constant dense<0.000000e+00> : vector<16xf32>
    %11 = vector.multi_reduction <add>, %0, %cst [1] : vector<16x32xf32> to vector<16xf32>
    %12 = vector.shape_cast %11 : vector<16xf32> to vector<16x1xf32>
    %cst_13 = arith.constant 3.200000e+01 : f32
    %13 = vector.broadcast %cst_13 : f32 to vector<16x1xf32>
    %14 = arith.divf %12, %13 : vector<16x1xf32>
    %15 = vector.broadcast %14 : vector<16x1xf32> to vector<16x32xf32>
    %16 = arith.subf %0, %15 : vector<16x32xf32>
    %17 = arith.mulf %16, %16 : vector<16x32xf32>
    %cst_14 = arith.constant dense<0.000000e+00> : vector<16xf32>
    %18 = vector.multi_reduction <add>, %17, %cst_14 [1] : vector<16x32xf32> to vector<16xf32>
    %19 = vector.shape_cast %18 : vector<16xf32> to vector<16x1xf32>
    %cst_15 = arith.constant 3.200000e+01 : f32
    %20 = vector.broadcast %cst_15 : f32 to vector<16x1xf32>
    %21 = arith.divf %19, %20 : vector<16x1xf32>
    %22 = vector.broadcast %14 : vector<16x1xf32> to vector<16x32xf32>
    %23 = arith.subf %0, %22 : vector<16x32xf32>
    %cst_16 = arith.constant 9.99999974E-6 : f32
    %24 = vector.broadcast %cst_16 : f32 to vector<16x1xf32>
    %25 = arith.addf %21, %24 : vector<16x1xf32>
    %26 = math.rsqrt %25 : vector<16x1xf32>
    %27 = vector.broadcast %26 : vector<16x1xf32> to vector<16x32xf32>
    %28 = arith.mulf %23, %27 : vector<16x32xf32>
    %29 = vector.broadcast %1 : vector<1x32xf32> to vector<16x32xf32>
    %30 = arith.mulf %28, %29 : vector<16x32xf32>
    %31 = vector.broadcast %2 : vector<1x32xf32> to vector<16x32xf32>
    %32 = arith.addf %30, %31 : vector<16x32xf32>
    %cst_17 = arith.constant dense<0.000000e+00> : vector<16x96xf32>
    %33 = tpu.matmul %32, %9, %cst_17 {dimension_numbers = #tpu.dot_dimension_numbers<[1], [0], [0], [1], [0, 0, 1, 1], [], []>} : vector<16x32xf32>, vector<32x96xf32>, vector<16x96xf32> -> vector<16x96xf32>
    %34 = vector.broadcast %3 : vector<1x96xf32> to vector<16x96xf32>
    %35 = arith.addf %33, %34 : vector<16x96xf32>
    %36 = vector.extract_strided_slice %35 {offsets = [0, 0], sizes = [16, 32], strides = [1, 1]} : vector<16x96xf32> to vector<16x32xf32>
    %37 = vector.extract_strided_slice %35 {offsets = [0, 32], sizes = [16, 32], strides = [1, 1]} : vector<16x96xf32> to vector<16x32xf32>
    %38 = vector.extract_strided_slice %35 {offsets = [0, 64], sizes = [16, 32], strides = [1, 1]} : vector<16x96xf32> to vector<16x32xf32>
    %39 = vector.extract_strided_slice %36 {offsets = [0, 0], sizes = [16, 8], strides = [1, 1]} : vector<16x32xf32> to vector<16x8xf32>
    %40 = vector.shape_cast %39 : vector<16x8xf32> to vector<2x8x8xf32>
    %41 = vector.extract_strided_slice %36 {offsets = [0, 8], sizes = [16, 8], strides = [1, 1]} : vector<16x32xf32> to vector<16x8xf32>
    %42 = vector.shape_cast %41 : vector<16x8xf32> to vector<2x8x8xf32>
    %43 = vector.extract_strided_slice %36 {offsets = [0, 16], sizes = [16, 8], strides = [1, 1]} : vector<16x32xf32> to vector<16x8xf32>
    %44 = vector.shape_cast %43 : vector<16x8xf32> to vector<2x8x8xf32>
    %45 = vector.extract_strided_slice %36 {offsets = [0, 24], sizes = [16, 8], strides = [1, 1]} : vector<16x32xf32> to vector<16x8xf32>
    %46 = vector.shape_cast %45 : vector<16x8xf32> to vector<2x8x8xf32>
    %47 = vector.shape_cast %40 : vector<2x8x8xf32> to vector<1x2x8x8xf32>
    %48 = vector.shape_cast %42 : vector<2x8x8xf32> to vector<1x2x8x8xf32>
    %49 = vector.shape_cast %44 : vector<2x8x8xf32> to vector<1x2x8x8xf32>
    %50 = vector.shape_cast %46 : vector<2x8x8xf32> to vector<1x2x8x8xf32>
    %51 = tpu.concatenate %47, %48, %49, %50 in 0 : vector<1x2x8x8xf32>, vector<1x2x8x8xf32>, vector<1x2x8x8xf32>, vector<1x2x8x8xf32> -> vector<4x2x8x8xf32>
    %52 = vector.shape_cast %51 : vector<4x2x8x8xf32> to vector<8x8x8xf32>
    %53 = vector.extract_strided_slice %37 {offsets = [0, 0], sizes = [16, 8], strides = [1, 1]} : vector<16x32xf32> to vector<16x8xf32>
    %54 = vector.shape_cast %53 : vector<16x8xf32> to vector<2x8x8xf32>
    %55 = vector.extract_strided_slice %37 {offsets = [0, 8], sizes = [16, 8], strides = [1, 1]} : vector<16x32xf32> to vector<16x8xf32>
    %56 = vector.shape_cast %55 : vector<16x8xf32> to vector<2x8x8xf32>
    %57 = vector.extract_strided_slice %37 {offsets = [0, 16], sizes = [16, 8], strides = [1, 1]} : vector<16x32xf32> to vector<16x8xf32>
    %58 = vector.shape_cast %57 : vector<16x8xf32> to vector<2x8x8xf32>
    %59 = vector.extract_strided_slice %37 {offsets = [0, 24], sizes = [16, 8], strides = [1, 1]} : vector<16x32xf32> to vector<16x8xf32>
    %60 = vector.shape_cast %59 : vector<16x8xf32> to vector<2x8x8xf32>
    %61 = vector.shape_cast %54 : vector<2x8x8xf32> to vector<1x2x8x8xf32>
    %62 = vector.shape_cast %56 : vector<2x8x8xf32> to vector<1x2x8x8xf32>
    %63 = vector.shape_cast %58 : vector<2x8x8xf32> to vector<1x2x8x8xf32>
    %64 = vector.shape_cast %60 : vector<2x8x8xf32> to vector<1x2x8x8xf32>
    %65 = tpu.concatenate %61, %62, %63, %64 in 0 : vector<1x2x8x8xf32>, vector<1x2x8x8xf32>, vector<1x2x8x8xf32>, vector<1x2x8x8xf32> -> vector<4x2x8x8xf32>
    %66 = vector.shape_cast %65 : vector<4x2x8x8xf32> to vector<8x8x8xf32>
    %67 = vector.extract_strided_slice %38 {offsets = [0, 0], sizes = [16, 8], strides = [1, 1]} : vector<16x32xf32> to vector<16x8xf32>
    %68 = vector.shape_cast %67 : vector<16x8xf32> to vector<2x8x8xf32>
    %69 = vector.extract_strided_slice %38 {offsets = [0, 8], sizes = [16, 8], strides = [1, 1]} : vector<16x32xf32> to vector<16x8xf32>
    %70 = vector.shape_cast %69 : vector<16x8xf32> to vector<2x8x8xf32>
    %71 = vector.extract_strided_slice %38 {offsets = [0, 16], sizes = [16, 8], strides = [1, 1]} : vector<16x32xf32> to vector<16x8xf32>
    %72 = vector.shape_cast %71 : vector<16x8xf32> to vector<2x8x8xf32>
    %73 = vector.extract_strided_slice %38 {offsets = [0, 24], sizes = [16, 8], strides = [1, 1]} : vector<16x32xf32> to vector<16x8xf32>
    %74 = vector.shape_cast %73 : vector<16x8xf32> to vector<2x8x8xf32>
    %75 = vector.shape_cast %68 : vector<2x8x8xf32> to vector<1x2x8x8xf32>
    %76 = vector.shape_cast %70 : vector<2x8x8xf32> to vector<1x2x8x8xf32>
    %77 = vector.shape_cast %72 : vector<2x8x8xf32> to vector<1x2x8x8xf32>
    %78 = vector.shape_cast %74 : vector<2x8x8xf32> to vector<1x2x8x8xf32>
    %79 = tpu.concatenate %75, %76, %77, %78 in 0 : vector<1x2x8x8xf32>, vector<1x2x8x8xf32>, vector<1x2x8x8xf32>, vector<1x2x8x8xf32> -> vector<4x2x8x8xf32>
    %80 = vector.shape_cast %79 : vector<4x2x8x8xf32> to vector<8x8x8xf32>
    %81 = tpu.iota {dimensions = array<i32: 0>} : vector<8x8xi32>
    %82 = tpu.iota {dimensions = array<i32: 1>} : vector<8x8xi32>
    %83 = arith.cmpi sle, %82, %81 : vector<8x8xi32>
    %84 = vector.shape_cast %83 : vector<8x8xi1> to vector<1x8x8xi1>
    %cst_18 = arith.constant dense<0.000000e+00> : vector<8x8x8xf32>
    %85 = tpu.matmul %52, %66, %cst_18 {dimension_numbers = #tpu.dot_dimension_numbers<[2], [2], [1], [1], [0, 0, 0, 1, 1, 1], [0], [0]>} : vector<8x8x8xf32>, vector<8x8x8xf32>, vector<8x8x8xf32> -> vector<8x8x8xf32>
    %cst_19 = arith.constant -1.000000e+30 : f32
    %86 = vector.shape_cast %84 : vector<1x8x8xi1> to vector<1x8x8xi1>
    %87 = vector.broadcast %86 : vector<1x8x8xi1> to vector<8x8x8xi1>
    %88 = vector.broadcast %cst_19 : f32 to vector<8x8x8xf32>
    %89 = arith.select %87, %85, %88 : vector<8x8x8xi1>, vector<8x8x8xf32>
    %cst_20 = arith.constant dense<0xFF800000> : vector<8x8xf32>
    %90 = vector.multi_reduction <maximumf>, %89, %cst_20 [2] : vector<8x8x8xf32> to vector<8x8xf32>
    %91 = vector.shape_cast %90 : vector<8x8xf32> to vector<8x8x1xf32>
    %92 = vector.broadcast %91 : vector<8x8x1xf32> to vector<8x8x8xf32>
    %93 = arith.subf %89, %92 : vector<8x8x8xf32>
    %94 = math.exp %93 : vector<8x8x8xf32>
    %cst_21 = arith.constant dense<0.000000e+00> : vector<8x8xf32>
    %95 = vector.multi_reduction <add>, %94, %cst_21 [2] : vector<8x8x8xf32> to vector<8x8xf32>
    %96 = vector.shape_cast %95 : vector<8x8xf32> to vector<8x8x1xf32>
    %97 = tpu.reciprocal %96 {approx = true} : vector<8x8x1xf32> -> vector<8x8x1xf32>
    %98 = vector.broadcast %97 : vector<8x8x1xf32> to vector<8x8x8xf32>
    %99 = arith.mulf %94, %98 : vector<8x8x8xf32>
    %cst_22 = arith.constant dense<0.000000e+00> : vector<8x8x8xf32>
    %100 = tpu.matmul %99, %80, %cst_22 {dimension_numbers = #tpu.dot_dimension_numbers<[2], [1], [1], [2], [0, 0, 0, 1, 1, 2], [0], [0]>} : vector<8x8x8xf32>, vector<8x8x8xf32>, vector<8x8x8xf32> -> vector<8x8x8xf32>
    %101 = vector.extract_strided_slice %100 {offsets = [0, 0, 0], sizes = [2, 8, 8], strides = [1, 1, 1]} : vector<8x8x8xf32> to vector<2x8x8xf32>
    %102 = vector.shape_cast %101 : vector<2x8x8xf32> to vector<16x8xf32>
    %103 = vector.extract_strided_slice %100 {offsets = [2, 0, 0], sizes = [2, 8, 8], strides = [1, 1, 1]} : vector<8x8x8xf32> to vector<2x8x8xf32>
    %104 = vector.shape_cast %103 : vector<2x8x8xf32> to vector<16x8xf32>
    %105 = vector.extract_strided_slice %100 {offsets = [4, 0, 0], sizes = [2, 8, 8], strides = [1, 1, 1]} : vector<8x8x8xf32> to vector<2x8x8xf32>
    %106 = vector.shape_cast %105 : vector<2x8x8xf32> to vector<16x8xf32>
    %107 = vector.extract_strided_slice %100 {offsets = [6, 0, 0], sizes = [2, 8, 8], strides = [1, 1, 1]} : vector<8x8x8xf32> to vector<2x8x8xf32>
    %108 = vector.shape_cast %107 : vector<2x8x8xf32> to vector<16x8xf32>
    %109 = tpu.concatenate %102, %104, %106, %108 in 1 : vector<16x8xf32>, vector<16x8xf32>, vector<16x8xf32>, vector<16x8xf32> -> vector<16x32xf32>
    %c0_23 = arith.constant 0 : index
    %c0_24 = arith.constant 0 : index
    %110 = vector.load %arg2[%c0_23, %c0_24] : memref<32x32xf32, #tpu.memory_space<vmem>>, vector<32x32xf32>
    %cst_25 = arith.constant dense<0.000000e+00> : vector<16x32xf32>
    %111 = tpu.matmul %109, %110, %cst_25 {dimension_numbers = #tpu.dot_dimension_numbers<[1], [0], [0], [1], [0, 0, 1, 1], [], []>} : vector<16x32xf32>, vector<32x32xf32>, vector<16x32xf32> -> vector<16x32xf32>
    %112 = vector.broadcast %4 : vector<1x32xf32> to vector<16x32xf32>
    %113 = arith.addf %111, %112 : vector<16x32xf32>
    %114 = arith.addf %0, %113 : vector<16x32xf32>
    %cst_26 = arith.constant dense<0.000000e+00> : vector<16xf32>
    %115 = vector.multi_reduction <add>, %114, %cst_26 [1] : vector<16x32xf32> to vector<16xf32>
    %116 = vector.shape_cast %115 : vector<16xf32> to vector<16x1xf32>
    %cst_27 = arith.constant 3.200000e+01 : f32
    %117 = vector.broadcast %cst_27 : f32 to vector<16x1xf32>
    %118 = arith.divf %116, %117 : vector<16x1xf32>
    %119 = vector.broadcast %118 : vector<16x1xf32> to vector<16x32xf32>
    %120 = arith.subf %114, %119 : vector<16x32xf32>
    %121 = arith.mulf %120, %120 : vector<16x32xf32>
    %cst_28 = arith.constant dense<0.000000e+00> : vector<16xf32>
    %122 = vector.multi_reduction <add>, %121, %cst_28 [1] : vector<16x32xf32> to vector<16xf32>
    %123 = vector.shape_cast %122 : vector<16xf32> to vector<16x1xf32>
    %cst_29 = arith.constant 3.200000e+01 : f32
    %124 = vector.broadcast %cst_29 : f32 to vector<16x1xf32>
    %125 = arith.divf %123, %124 : vector<16x1xf32>
    %126 = vector.broadcast %118 : vector<16x1xf32> to vector<16x32xf32>
    %127 = arith.subf %114, %126 : vector<16x32xf32>
    %cst_30 = arith.constant 9.99999974E-6 : f32
    %128 = vector.broadcast %cst_30 : f32 to vector<16x1xf32>
    %129 = arith.addf %125, %128 : vector<16x1xf32>
    %130 = math.rsqrt %129 : vector<16x1xf32>
    %131 = vector.broadcast %130 : vector<16x1xf32> to vector<16x32xf32>
    %132 = arith.mulf %127, %131 : vector<16x32xf32>
    %133 = vector.broadcast %5 : vector<1x32xf32> to vector<16x32xf32>
    %134 = arith.mulf %132, %133 : vector<16x32xf32>
    %135 = vector.broadcast %6 : vector<1x32xf32> to vector<16x32xf32>
    %136 = arith.addf %134, %135 : vector<16x32xf32>
    %cst_31 = arith.constant dense<0.000000e+00> : vector<16x128xf32>
    %137 = tpu.matmul %136, %10, %cst_31 {dimension_numbers = #tpu.dot_dimension_numbers<[1], [0], [0], [1], [0, 0, 1, 1], [], []>} : vector<16x32xf32>, vector<32x128xf32>, vector<16x128xf32> -> vector<16x128xf32>
    %138 = vector.broadcast %7 : vector<1x128xf32> to vector<16x128xf32>
    %139 = arith.addf %137, %138 : vector<16x128xf32>
    %cst_32 = arith.constant 5.000000e-01 : f32
    %140 = vector.broadcast %cst_32 : f32 to vector<16x128xf32>
    %141 = arith.mulf %140, %139 : vector<16x128xf32>
    %cst_33 = arith.constant 4.471500e-02 : f32
    %142 = vector.broadcast %cst_33 : f32 to vector<16x128xf32>
    %143 = arith.mulf %142, %139 : vector<16x128xf32>
    %144 = arith.mulf %143, %139 : vector<16x128xf32>
    %145 = arith.mulf %144, %139 : vector<16x128xf32>
    %146 = arith.addf %139, %145 : vector<16x128xf32>
    %cst_34 = arith.constant 0.797884583 : f32
    %147 = vector.broadcast %cst_34 : f32 to vector<16x128xf32>
    %148 = arith.mulf %147, %146 : vector<16x128xf32>
    %149 = math.tanh %148 : vector<16x128xf32>
    %cst_35 = arith.constant 1.000000e+00 : f32
    %150 = vector.broadcast %cst_35 : f32 to vector<16x128xf32>
    %151 = arith.addf %150, %149 : vector<16x128xf32>
    %152 = arith.mulf %141, %151 : vector<16x128xf32>
    %c0_36 = arith.constant 0 : index
    %c0_37 = arith.constant 0 : index
    %153 = vector.load %arg3[%c0_36, %c0_37] : memref<128x32xf32, #tpu.memory_space<vmem>>, vector<128x32xf32>
    %cst_38 = arith.constant dense<0.000000e+00> : vector<16x32xf32>
    %154 = tpu.matmul %152, %153, %cst_38 {dimension_numbers = #tpu.dot_dimension_numbers<[1], [0], [0], [1], [0, 0, 1, 1], [], []>} : vector<16x128xf32>, vector<128x32xf32>, vector<16x32xf32> -> vector<16x32xf32>
    %155 = vector.broadcast %8 : vector<1x32xf32> to vector<16x32xf32>
    %156 = arith.addf %154, %155 : vector<16x32xf32>
    %157 = arith.addf %114, %156 : vector<16x32xf32>
    %c0_39 = arith.constant 0 : index
    %c0_40 = arith.constant 0 : index
    %158 = vector.load %arg5[%c0_39, %c0_40] : memref<16x32xf32, #tpu.memory_space<vmem>>, vector<16x32xf32>
    tpu.vector_store %arg5[%c0_39, %c0_40], %157 {strides = array<i32>} : memref<16x32xf32, #tpu.memory_space<vmem>>, vector<16x32xf32>,
    return
  }
}

</mosaic_0001>

<llo_original>
// kernel: tpu_custom_call.1
$region0: #{tpu_custom_call.1}
  #allocation0 [shape = 'u32[]', space=smem, size = 0x4, offset = 0x4, fixed_abs, tag = 'smem constant byte address 0x4 - core index']
  #allocation1 [shape = 'u32[144,128]{1,0:T(1,128)}', space=vmem, size = 0x12000, scoped, tag = 'internal scratch']
  %s0 = inlined_call_operand.vmem [shape: f32[16,32], index: 0, kind: input, shape index: {}]
  %s1 = inlined_call_operand.vmem [shape: f32[32,256], index: 1, kind: input, shape index: {}]
  %s2 = inlined_call_operand.vmem [shape: f32[32,32], index: 2, kind: input, shape index: {}]
  %s3 = inlined_call_operand.vmem [shape: f32[128,32], index: 3, kind: input, shape index: {}]
  %s4 = inlined_call_operand.vmem [shape: f32[8,128], index: 4, kind: input, shape index: {}]
  %s5 = inlined_call_operand.hbm [shape: f32[16,32], index: 5, kind: output, shape index: {}]
  %s6 = sld [smem:[#allocation0]]
  $region30: #{tpu_custom_call.1} parent=0
    _
  %s8 = ssub.s32 1, %s6
  %s9 = scalar_select 0, %s8, %s6
  $region1: #{tpu_custom_call.1} parent=0
    #allocation2 [shape = 'u8[8192]{0}', space=vmem, size = 0x2000, scoped, tag = 'output window, operand 0, single buffered']
    #allocation3 [shape = 's32[1]{0}', space=sflag, size = 0x4, scoped, tag = 'scoped memory for tpu_custom_call.1']
    %10 = vsyncpa [#allocation3], 0
    // Predicated region
    $region2: #{tpu_custom_call.1} parent=1 // pred_check
      _
    $region3: #{tpu_custom_call.1} parent=1 // pred_check_branch
      %12 = sbr.rel (0) target = $region5
    $region4: #{tpu_custom_call.1} parent=1 // pred_region
      _
    $region5: #{tpu_custom_call.1} parent=1 // pred_fallthru
      _
    // Predicated region
    $region6: #{tpu_custom_call.1} parent=1 // pred_check
      _
    $region7: #{tpu_custom_call.1} parent=1 // pred_check_branch
      %14 = sbr.rel (0) target = $region9
    $region8: #{tpu_custom_call.1} parent=1 // pred_region
      _
    $region9: #{tpu_custom_call.1} parent=1 // pred_fallthru
      _
    // Predicated region
    $region10: #{tpu_custom_call.1} parent=1 // pred_check
      _
    $region11: #{tpu_custom_call.1} parent=1 // pred_check_branch
      %16 = sbr.rel (0) target = $region13
    $region12: #{tpu_custom_call.1} parent=1 // pred_region
      _
    $region13: #{tpu_custom_call.1} parent=1 // pred_fallthru
      _
    // Predicated region
    $region14: #{tpu_custom_call.1} parent=1 // pred_check
      _
    $region15: #{tpu_custom_call.1} parent=1 // pred_check_branch
      %18 = sbr.rel (0) target = $region17
    $region16: #{tpu_custom_call.1} parent=1 // pred_region
      _
    $region17: #{tpu_custom_call.1} parent=1 // pred_fallthru
      _
    // Predicated region
    $region18: #{tpu_custom_call.1} parent=1 // pred_check
      _
    $region19: #{tpu_custom_call.1} parent=1 // pred_check_branch
      %20 = sbr.rel (0) target = $region21
    $region20: #{tpu_custom_call.1} parent=1 // pred_region
      _
    $region21: #{tpu_custom_call.1} parent=1 // pred_fallthru
      _
    %v21 = vld [vmem:[%s0] sm:$0xff]
    %v22 = vld [vmem:[%s0 + $0x8] sm:$0xff]
    %v23 = vld [vmem:[%s4] sm:$0x1]
    %v24 = vld [vmem:[%s4 + $0x1] sm:$0x1]
    %v25 = vld [vmem:[%s4 + $0x2] sm:$0x1]
    %v26 = vld [vmem:[%s4 + $0x3] sm:$0x1]
    %v27 = vld [vmem:[%s4 + $0x4] sm:$0x1]
    %v28 = vld [vmem:[%s4 + $0x5] sm:$0x1]
    %v29 = vld [vmem:[%s4 + $0x6] sm:$0x1]
    %v30 = vld [vmem:[%s4 + $0x7] sm:$0x1]
    %v31 = vld [vmem:[%s1] sm:$0xff]
    %v32 = vld [vmem:[%s1 + $0x10] sm:$0xff]
    %v33 = vld [vmem:[%s1 + $0x20] sm:$0xff]
    %v34 = vld [vmem:[%s1 + $0x30] sm:$0xff]
    %v35 = vld [vmem:[%s1 + $0x8] sm:$0xff]
    %v36 = vld [vmem:[%s1 + $0x18] sm:$0xff]
    %v37 = vld [vmem:[%s1 + $0x28] sm:$0xff]
    %v38 = vld [vmem:[%s1 + $0x38] sm:$0xff]
    %vm39 = vcmask 261120
    %v40 = vsel %vm39, %v21, 0.0
    %41 = vadd.xlane.f32.xlu0 %v40
    %v42 = vpop.xlane.xlu0 %41
    %v43 = vsel %vm39, %v22, 0.0
    %44 = vadd.xlane.f32.xlu0 %v43
    %v45 = vpop.xlane.xlu0 %44
    %v46 = vrcp.pop 32.0
    %v47 = vmul.f32 %v42, %v46
    %v48 = vmul.f32 %v45, %v46
    %v49 = vsub.f32 %v21, %v47
    %v50 = vsub.f32 %v22, %v48
    %v51 = vmul.f32 %v49, %v49
    %v52 = vmul.f32 %v50, %v50
    %v53 = vsel %vm39, %v51, 0.0
    %54 = vadd.xlane.f32.xlu0 %v53
    %v55 = vpop.xlane.xlu0 %54
    %v56 = vsel %vm39, %v52, 0.0
    %57 = vadd.xlane.f32.xlu0 %v56
    %v58 = vpop.xlane.xlu0 %57
    %v59 = vmul.f32 %v55, %v46
    %v60 = vmul.f32 %v58, %v46
    %v61 = vadd.f32 %v59, 1e-05
    %v62 = vadd.f32 %v60, 1e-05
    %v63 = vrsqrt.pop %v61
    %v64 = vrsqrt.pop %v62
    %v65 = vmul.f32 %v49, %v63
    %v66 = vmul.f32 %v50, %v64
    %v67 = vlaneseq
    %v68 = vshrl.u32 %v67, 7
    %v69 = vsub.s32 0, %v68
    %v70 = vrot.slane %v23, %v69
    %v71 = vmul.f32 %v65, %v70
    %v72 = vmul.f32 %v66, %v70
    %v73 = vlaneseq
    %v74 = vshrl.u32 %v73, 7
    %v75 = vsub.s32 0, %v74
    %v76 = vrot.slane %v24, %v75
    %v77 = vadd.f32 %v71, %v76
    %v78 = vadd.f32 %v72, %v76
    %v79 = vlaneseq
    %v80 = vshrl.u32 %v79, 7
    %v81 = vsub.s32 0, %v80
    %v82 = vrot.slane %v25, %v81
    %v84 = vsel %vm39, %v77, 0
    %v87 = vsel %vm39, %v78, 0
    %89 = vmatprep.subr.mxu0 0.0
    %90 = vmatpush1.msra.mxu0 %v31
    %91 = vmatprep.subr.mxu0 0.0
    %92 = vmatpush1.msra.mxu0 %v32
    %93 = vmatprep.subr.mxu0 0.0
    %94 = vmatpush1.msra.mxu0 %v33
    %95 = vmatprep.subr.mxu0 0.0
    %96 = vmatpush1.msra.mxu0 %v34
    %97 = vmatprep.subr.mxu0 0.0
    %98 = vmatpush1.msra.mxu0 0.0
    %99 = vmatprep.subr.mxu0 0.0
    %100 = vmatpush1.msra.mxu0 0.0
    %101 = vmatprep.subr.mxu0 0.0
    %102 = vmatpush1.msra.mxu0 0.0
    %103 = vmatprep.subr.mxu0 0.0
    %104 = vmatpush1.msra.mxu0 0.0
    %105 = vmatprep.subr.mxu0 0.0
    %106 = vmatpush1.msra.mxu0 0.0
    %107 = vmatprep.subr.mxu0 0.0
    %108 = vmatpush1.msra.mxu0 0.0
    %109 = vmatprep.subr.mxu0 0.0
    %110 = vmatpush1.msra.mxu0 0.0
    %111 = vmatprep.subr.mxu0 0.0
    %112 = vmatpush1.msra.mxu0 0.0
    %113 = vmatprep.subr.mxu0 0.0
    %114 = vmatpush1.msra.mxu0 0.0
    %115 = vmatprep.subr.mxu0 0.0
    %116 = vmatpush1.msra.mxu0 0.0
    %117 = vmatprep.subr.mxu0 0.0
    %118 = vmatpush1.msra.mxu0 0.0
    %119 = vmatprep.subr.mxu0 0.0
    %120 = vmatpush1.msra.mxu0 0.0
    %121 = vmatprep.subr.mxu0 0.0
    %122 = vmatpush1.msra.mxu0 0.0
    %123 = vmatprep.subr.mxu0 0.0
    %124 = vmatpush1.msra.mxu0 0.0
    %125 = vmatprep.subr.mxu0 0.0
    %126 = vmatpush1.msra.mxu0 0.0
    %127 = vmatprep.subr.mxu0 0.0
    %128 = vmatpush1.msra.mxu0 0.0
    %129 = vmatprep.subr.mxu0 0.0
    %130 = vmatpush1.msra.mxu0 0.0
    %131 = vmatprep.subr.mxu0 0.0
    %132 = vmatpush1.msra.mxu0 0.0
    %133 = vmatprep.subr.mxu0 0.0
    %134 = vmatpush1.msra.mxu0 0.0
    %135 = vmatprep.subr.mxu0 0.0
    %136 = vmatpush1.msra.mxu0 0.0
    %137 = vmatprep.subr.mxu0 0.0
    %138 = vmatpush1.msra.mxu0 0.0
    %139 = vmatprep.subr.mxu0 0.0
    %140 = vmatpush1.msra.mxu0 0.0
    %141 = vmatprep.subr.mxu0 0.0
    %142 = vmatpush1.msra.mxu0 0.0
    %143 = vmatprep.subr.mxu0 0.0
    %144 = vmatpush1.msra.mxu0 0.0
    %145 = vmatprep.subr.mxu0 0.0
    %146 = vmatpush1.msra.mxu0 0.0
    %147 = vmatprep.subr.mxu0 0.0
    %148 = vmatpush1.msra.mxu0 0.0
    %149 = vmatprep.subr.mxu0 0.0
    %150 = vmatpush1.msra.mxu0 0.0
    %151 = vmatprep.subr.mxu0 0.0
    %152 = vmatpush1.msra.mxu0 0.0
    %153 = vmatprep.mubr.f32.mxu0 0.0
    %154 = vmatmul.mubr.f32.gmra.mrb[0].mxu0 %v84
    %v155 = vpop.f32.mrb[0].mxu0
    %v156 = vadd.f32 %v82, %v155
    %v157 = vpop.f32.mrb[0].mxu0
    %158 = vmatprep.mubr.f32.mxu0 0.0
    %159 = vmatmul.mubr.f32.gmra.mrb[0].mxu0 %v87
    %v160 = vpop.f32.mrb[0].mxu0
    %v161 = vadd.f32 %v82, %v160
    %v162 = vpop.f32.mrb[0].mxu0
    %163 = vdwg.mxu0
    %166 = vrot.lane.b32.xlu0 %v156, 120
    %v167 = vpop.permute.xlu0 %166
    %168 = vrot.lane.b32.xlu0 %v161, 120
    %v169 = vpop.permute.xlu0 %168
    %170 = vrot.lane.b32.xlu0 %v156, 112
    %v171 = vpop.permute.xlu0 %170
    %172 = vrot.lane.b32.xlu0 %v161, 112
    %v173 = vpop.permute.xlu0 %172
    %174 = vrot.lane.b32.xlu0 %v156, 104
    %v175 = vpop.permute.xlu0 %174
    %176 = vrot.lane.b32.xlu0 %v161, 104
    %v177 = vpop.permute.xlu0 %176
    %v178 = vlaneseq
    %v179 = vshrl.u32 %v178, 7
    %v180 = vlaneseq
    %v181 = vand.u32 %v180, 127
    %vm182 = vcmp.le.s32.totalorder %v181, %v179
    %183 = vrot.lane.b32.xlu0 %v156, 96
    %v184 = vpop.permute.xlu0 %183
    %vm185 = vcmask 64512
    %v186 = vsel %vm185, %v156, 0
    %v188 = vsel %vm185, %v184, 0
    %190 = vmatprep.subr.mxu0 0.0
    %191 = vmatpush1.xpose.msra.mxu0 %v188
    %192 = vmatprep.subr.mxu0 0.0
    %193 = vmatpush1.xpose.msra.mxu0 0.0
    %194 = vmatprep.subr.mxu0 0.0
    %195 = vmatpush1.xpose.msra.mxu0 0.0
    %196 = vmatprep.subr.mxu0 0.0
    %197 = vmatpush1.xpose.msra.mxu0 0.0
    %198 = vmatprep.subr.mxu0 0.0
    %199 = vmatpush1.xpose.msra.mxu0 0.0
    %200 = vmatprep.subr.mxu0 0.0
    %201 = vmatpush1.xpose.msra.mxu0 0.0
    %202 = vmatprep.subr.mxu0 0.0
    %203 = vmatpush1.xpose.msra.mxu0 0.0
    %204 = vmatprep.subr.mxu0 0.0
    %205 = vmatpush1.xpose.msra.mxu0 0.0
    %206 = vmatprep.subr.mxu0 0.0
    %207 = vmatpush1.xpose.msra.mxu0 0.0
    %208 = vmatprep.subr.mxu0 0.0
    %209 = vmatpush1.xpose.msra.mxu0 0.0
    %210 = vmatprep.subr.mxu0 0.0
    %211 = vmatpush1.xpose.msra.mxu0 0.0
    %212 = vmatprep.subr.mxu0 0.0
    %213 = vmatpush1.xpose.msra.mxu0 0.0
    %214 = vmatprep.subr.mxu0 0.0
    %215 = vmatpush1.xpose.msra.mxu0 0.0
    %216 = vmatprep.subr.mxu0 0.0
    %217 = vmatpush1.xpose.msra.mxu0 0.0
    %218 = vmatprep.subr.mxu0 0.0
    %219 = vmatpush1.xpose.msra.mxu0 0.0
    %220 = vmatprep.subr.mxu0 0.0
    %221 = vmatpush1.xpose.msra.mxu0 0.0
    %222 = vmatprep.subr.mxu0 0.0
    %223 = vmatpush1.xpose.msra.mxu0 0.0
    %224 = vmatprep.subr.mxu0 0.0
    %225 = vmatpush1.xpose.msra.mxu0 0.0
    %226 = vmatprep.subr.mxu0 0.0
    %227 = vmatpush1.xpose.msra.mxu0 0.0
    %228 = vmatprep.subr.mxu0 0.0
    %229 = vmatpush1.xpose.msra.mxu0 0.0
    %230 = vmatprep.subr.mxu0 0.0
    %231 = vmatpush1.xpose.msra.mxu0 0.0
    %232 = vmatprep.subr.mxu0 0.0
    %233 = vmatpush1.xpose.msra.mxu0 0.0
    %234 = vmatprep.subr.mxu0 0.0
    %235 = vmatpush1.xpose.msra.mxu0 0.0
    %236 = vmatprep.subr.mxu0 0.0
    %237 = vmatpush1.xpose.msra.mxu0 0.0
    %238 = vmatprep.subr.mxu0 0.0
    %239 = vmatpush1.xpose.msra.mxu0 0.0
    %240 = vmatprep.subr.mxu0 0.0
    %241 = vmatpush1.xpose.msra.mxu0 0.0
    %242 = vmatprep.subr.mxu0 0.0
    %243 = vmatpush1.xpose.msra.mxu0 0.0
    %244 = vmatprep.subr.mxu0 0.0
    %245 = vmatpush1.xpose.msra.mxu0 0.0
    %246 = vmatprep.subr.mxu0 0.0
    %247 = vmatpush1.xpose.msra.mxu0 0.0
    %248 = vmatprep.subr.mxu0 0.0
    %249 = vmatpush1.xpose.msra.mxu0 0.0
    %250 = vmatprep.subr.mxu0 0.0
    %251 = vmatpush1.xpose.msra.mxu0 0.0
    %252 = vmatprep.subr.mxu0 0.0
    %253 = vmatpush1.xpose.msra.mxu0 0.0
    %254 = vmatprep.mubr.f32.mxu0 0.0
    %255 = vmatmul.mubr.f32.gmra.mrb[0].mxu0 %v186
    %v256 = vpop.f32.mrb[0].mxu0
    %v257 = vadd.f32 0.0, %v256
    %v258 = vpop.f32.mrb[0].mxu0
    %259 = vdwg.mxu0
    %260 = vrot.lane.b32.xlu0 %v161, 96
    %v261 = vpop.permute.xlu0 %260
    %v262 = vsel %vm185, %v161, 0
    %v264 = vsel %vm185, %v261, 0
    %266 = vmatprep.subr.mxu0 0.0
    %267 = vmatpush1.xpose.msra.mxu0 %v264
    %268 = vmatprep.subr.mxu0 0.0
    %269 = vmatpush1.xpose.msra.mxu0 0.0
    %270 = vmatprep.subr.mxu0 0.0
    %271 = vmatpush1.xpose.msra.mxu0 0.0
    %272 = vmatprep.subr.mxu0 0.0
    %273 = vmatpush1.xpose.msra.mxu0 0.0
    %274 = vmatprep.subr.mxu0 0.0
    %275 = vmatpush1.xpose.msra.mxu0 0.0
    %276 = vmatprep.subr.mxu0 0.0
    %277 = vmatpush1.xpose.msra.mxu0 0.0
    %278 = vmatprep.subr.mxu0 0.0
    %279 = vmatpush1.xpose.msra.mxu0 0.0
    %280 = vmatprep.subr.mxu0 0.0
    %281 = vmatpush1.xpose.msra.mxu0 0.0
    %282 = vmatprep.subr.mxu0 0.0
    %283 = vmatpush1.xpose.msra.mxu0 0.0
    %284 = vmatprep.subr.mxu0 0.0
    %285 = vmatpush1.xpose.msra.mxu0 0.0
    %286 = vmatprep.subr.mxu0 0.0
    %287 = vmatpush1.xpose.msra.mxu0 0.0
    %288 = vmatprep.subr.mxu0 0.0
    %289 = vmatpush1.xpose.msra.mxu0 0.0
    %290 = vmatprep.subr.mxu0 0.0
    %291 = vmatpush1.xpose.msra.mxu0 0.0
    %292 = vmatprep.subr.mxu0 0.0
    %293 = vmatpush1.xpose.msra.mxu0 0.0
    %294 = vmatprep.subr.mxu0 0.0
    %295 = vmatpush1.xpose.msra.mxu0 0.0
    %296 = vmatprep.subr.mxu0 0.0
    %297 = vmatpush1.xpose.msra.mxu0 0.0
    %298 = vmatprep.subr.mxu0 0.0
    %299 = vmatpush1.xpose.msra.mxu0 0.0
    %300 = vmatprep.subr.mxu0 0.0
    %301 = vmatpush1.xpose.msra.mxu0 0.0
    %302 = vmatprep.subr.mxu0 0.0
    %303 = vmatpush1.xpose.msra.mxu0 0.0
    %304 = vmatprep.subr.mxu0 0.0
    %305 = vmatpush1.xpose.msra.mxu0 0.0
    %306 = vmatprep.subr.mxu0 0.0
    %307 = vmatpush1.xpose.msra.mxu0 0.0
    %308 = vmatprep.subr.mxu0 0.0
    %309 = vmatpush1.xpose.msra.mxu0 0.0
    %310 = vmatprep.subr.mxu0 0.0
    %311 = vmatpush1.xpose.msra.mxu0 0.0
    %312 = vmatprep.subr.mxu0 0.0
    %313 = vmatpush1.xpose.msra.mxu0 0.0
    %314 = vmatprep.subr.mxu0 0.0
    %315 = vmatpush1.xpose.msra.mxu0 0.0
    %316 = vmatprep.subr.mxu0 0.0
    %317 = vmatpush1.xpose.msra.mxu0 0.0
    %318 = vmatprep.subr.mxu0 0.0
    %319 = vmatpush1.xpose.msra.mxu0 0.0
    %320 = vmatprep.subr.mxu0 0.0
    %321 = vmatpush1.xpose.msra.mxu0 0.0
    %322 = vmatprep.subr.mxu0 0.0
    %323 = vmatpush1.xpose.msra.mxu0 0.0
    %324 = vmatprep.subr.mxu0 0.0
    %325 = vmatpush1.xpose.msra.mxu0 0.0
    %326 = vmatprep.subr.mxu0 0.0
    %327 = vmatpush1.xpose.msra.mxu0 0.0
    %328 = vmatprep.subr.mxu0 0.0
    %329 = vmatpush1.xpose.msra.mxu0 0.0
    %330 = vmatprep.mubr.f32.mxu0 0.0
    %331 = vmatmul.mubr.f32.gmra.mrb[0].mxu0 %v262
    %v332 = vpop.f32.mrb[0].mxu0
    %v333 = vadd.f32 0.0, %v332
    %v334 = vpop.f32.mrb[0].mxu0
    %335 = vdwg.mxu0
    %336 = vrot.lane.b32.xlu0 %v167, 96
    %v337 = vpop.permute.xlu0 %336
    %v338 = vsel %vm185, %v167, 0
    %v340 = vsel %vm185, %v337, 0
    %342 = vmatprep.subr.mxu0 0.0
    %343 = vmatpush1.xpose.msra.mxu0 %v340
    %344 = vmatprep.subr.mxu0 0.0
    %345 = vmatpush1.xpose.msra.mxu0 0.0
    %346 = vmatprep.subr.mxu0 0.0
    %347 = vmatpush1.xpose.msra.mxu0 0.0
    %348 = vmatprep.subr.mxu0 0.0
    %349 = vmatpush1.xpose.msra.mxu0 0.0
    %350 = vmatprep.subr.mxu0 0.0
    %351 = vmatpush1.xpose.msra.mxu0 0.0
    %352 = vmatprep.subr.mxu0 0.0
    %353 = vmatpush1.xpose.msra.mxu0 0.0
    %354 = vmatprep.subr.mxu0 0.0
    %355 = vmatpush1.xpose.msra.mxu0 0.0
    %356 = vmatprep.subr.mxu0 0.0
    %357 = vmatpush1.xpose.msra.mxu0 0.0
    %358 = vmatprep.subr.mxu0 0.0
    %359 = vmatpush1.xpose.msra.mxu0 0.0
    %360 = vmatprep.subr.mxu0 0.0
    %361 = vmatpush1.xpose.msra.mxu0 0.0
    %362 = vmatprep.subr.mxu0 0.0
    %363 = vmatpush1.xpose.msra.mxu0 0.0
    %364 = vmatprep.subr.mxu0 0.0
    %365 = vmatpush1.xpose.msra.mxu0 0.0
    %366 = vmatprep.subr.mxu0 0.0
    %367 = vmatpush1.xpose.msra.mxu0 0.0
    %368 = vmatprep.subr.mxu0 0.0
    %369 = vmatpush1.xpose.msra.mxu0 0.0
    %370 = vmatprep.subr.mxu0 0.0
    %371 = vmatpush1.xpose.msra.mxu0 0.0
    %372 = vmatprep.subr.mxu0 0.0
    %373 = vmatpush1.xpose.msra.mxu0 0.0
    %374 = vmatprep.subr.mxu0 0.0
    %375 = vmatpush1.xpose.msra.mxu0 0.0
    %376 = vmatprep.subr.mxu0 0.0
    %377 = vmatpush1.xpose.msra.mxu0 0.0
    %378 = vmatprep.subr.mxu0 0.0
    %379 = vmatpush1.xpose.msra.mxu0 0.0
    %380 = vmatprep.subr.mxu0 0.0
    %381 = vmatpush1.xpose.msra.mxu0 0.0
    %382 = vmatprep.subr.mxu0 0.0
    %383 = vmatpush1.xpose.msra.mxu0 0.0
    %384 = vmatprep.subr.mxu0 0.0
    %385 = vmatpush1.xpose.msra.mxu0 0.0
    %386 = vmatprep.subr.mxu0 0.0
    %387 = vmatpush1.xpose.msra.mxu0 0.0
    %388 = vmatprep.subr.mxu0 0.0
    %389 = vmatpush1.xpose.msra.mxu0 0.0
    %390 = vmatprep.subr.mxu0 0.0
    %391 = vmatpush1.xpose.msra.mxu0 0.0
    %392 = vmatprep.subr.mxu0 0.0
    %393 = vmatpush1.xpose.msra.mxu0 0.0
    %394 = vmatprep.subr.mxu0 0.0
    %395 = vmatpush1.xpose.msra.mxu0 0.0
    %396 = vmatprep.subr.mxu0 0.0
    %397 = vmatpush1.xpose.msra.mxu0 0.0
    %398 = vmatprep.subr.mxu0 0.0
    %399 = vmatpush1.xpose.msra.mxu0 0.0
    %400 = vmatprep.subr.mxu0 0.0
    %401 = vmatpush1.xpose.msra.mxu0 0.0
    %402 = vmatprep.subr.mxu0 0.0
    %403 = vmatpush1.xpose.msra.mxu0 0.0
    %404 = vmatprep.subr.mxu0 0.0
    %405 = vmatpush1.xpose.msra.mxu0 0.0
    %406 = vmatprep.mubr.f32.mxu0 0.0
    %407 = vmatmul.mubr.f32.gmra.mrb[0].mxu0 %v338
    %v408 = vpop.f32.mrb[0].mxu0
    %v409 = vadd.f32 0.0, %v408
    %v410 = vpop.f32.mrb[0].mxu0
    %411 = vdwg.mxu0
    %412 = vrot.lane.b32.xlu0 %v169, 96
    %v413 = vpop.permute.xlu0 %412
    %v414 = vsel %vm185, %v169, 0
    %v416 = vsel %vm185, %v413, 0
    %418 = vmatprep.subr.mxu0 0.0
    %419 = vmatpush1.xpose.msra.mxu0 %v416
    %420 = vmatprep.subr.mxu0 0.0
    %421 = vmatpush1.xpose.msra.mxu0 0.0
    %422 = vmatprep.subr.mxu0 0.0
    %423 = vmatpush1.xpose.msra.mxu0 0.0
    %424 = vmatprep.subr.mxu0 0.0
    %425 = vmatpush1.xpose.msra.mxu0 0.0
    %426 = vmatprep.subr.mxu0 0.0
    %427 = vmatpush1.xpose.msra.mxu0 0.0
    %428 = vmatprep.subr.mxu0 0.0
    %429 = vmatpush1.xpose.msra.mxu0 0.0
    %430 = vmatprep.subr.mxu0 0.0
    %431 = vmatpush1.xpose.msra.mxu0 0.0
    %432 = vmatprep.subr.mxu0 0.0
    %433 = vmatpush1.xpose.msra.mxu0 0.0
    %434 = vmatprep.subr.mxu0 0.0
    %435 = vmatpush1.xpose.msra.mxu0 0.0
    %436 = vmatprep.subr.mxu0 0.0
    %437 = vmatpush1.xpose.msra.mxu0 0.0
    %438 = vmatprep.subr.mxu0 0.0
    %439 = vmatpush1.xpose.msra.mxu0 0.0
    %440 = vmatprep.subr.mxu0 0.0
    %441 = vmatpush1.xpose.msra.mxu0 0.0
    %442 = vmatprep.subr.mxu0 0.0
    %443 = vmatpush1.xpose.msra.mxu0 0.0
    %444 = vmatprep.subr.mxu0 0.0
    %445 = vmatpush1.xpose.msra.mxu0 0.0
    %446 = vmatprep.subr.mxu0 0.0
    %447 = vmatpush1.xpose.msra.mxu0 0.0
    %448 = vmatprep.subr.mxu0 0.0
    %449 = vmatpush1.xpose.msra.mxu0 0.0
    %450 = vmatprep.subr.mxu0 0.0
    %451 = vmatpush1.xpose.msra.mxu0 0.0
    %452 = vmatprep.subr.mxu0 0.0
    %453 = vmatpush1.xpose.msra.mxu0 0.0
    %454 = vmatprep.subr.mxu0 0.0
    %455 = vmatpush1.xpose.msra.mxu0 0.0
    %456 = vmatprep.subr.mxu0 0.0
    %457 = vmatpush1.xpose.msra.mxu0 0.0
    %458 = vmatprep.subr.mxu0 0.0
    %459 = vmatpush1.xpose.msra.mxu0 0.0
    %460 = vmatprep.subr.mxu0 0.0
    %461 = vmatpush1.xpose.msra.mxu0 0.0
    %462 = vmatprep.subr.mxu0 0.0
    %463 = vmatpush1.xpose.msra.mxu0 0.0
    %464 = vmatprep.subr.mxu0 0.0
    %465 = vmatpush1.xpose.msra.mxu0 0.0
    %466 = vmatprep.subr.mxu0 0.0
    %467 = vmatpush1.xpose.msra.mxu0 0.0
    %468 = vmatprep.subr.mxu0 0.0
    %469 = vmatpush1.xpose.msra.mxu0 0.0
    %470 = vmatprep.subr.mxu0 0.0
    %471 = vmatpush1.xpose.msra.mxu0 0.0
    %472 = vmatprep.subr.mxu0 0.0
    %473 = vmatpush1.xpose.msra.mxu0 0.0
    %474 = vmatprep.subr.mxu0 0.0
    %475 = vmatpush1.xpose.msra.mxu0 0.0
    %476 = vmatprep.subr.mxu0 0.0
    %477 = vmatpush1.xpose.msra.mxu0 0.0
    %478 = vmatprep.subr.mxu0 0.0
    %479 = vmatpush1.xpose.msra.mxu0 0.0
    %480 = vmatprep.subr.mxu0 0.0
    %481 = vmatpush1.xpose.msra.mxu0 0.0
    %482 = vmatprep.mubr.f32.mxu0 0.0
    %483 = vmatmul.mubr.f32.gmra.mrb[0].mxu0 %v414
    %v484 = vpop.f32.mrb[0].mxu0
    %v485 = vadd.f32 0.0, %v484
    %v486 = vpop.f32.mrb[0].mxu0
    %487 = vdwg.mxu0
    %488 = vrot.lane.b32.xlu0 %v171, 96
    %v489 = vpop.permute.xlu0 %488
    %v490 = vsel %vm185, %v171, 0
    %v492 = vsel %vm185, %v489, 0
    %494 = vmatprep.subr.mxu0 0.0
    %495 = vmatpush1.xpose.msra.mxu0 %v492
    %496 = vmatprep.subr.mxu0 0.0
    %497 = vmatpush1.xpose.msra.mxu0 0.0
    %498 = vmatprep.subr.mxu0 0.0
    %499 = vmatpush1.xpose.msra.mxu0 0.0
    %500 = vmatprep.subr.mxu0 0.0
    %501 = vmatpush1.xpose.msra.mxu0 0.0
    %502 = vmatprep.subr.mxu0 0.0
    %503 = vmatpush1.xpose.msra.mxu0 0.0
    %504 = vmatprep.subr.mxu0 0.0
    %505 = vmatpush1.xpose.msra.mxu0 0.0
    %506 = vmatprep.subr.mxu0 0.0
    %507 = vmatpush1.xpose.msra.mxu0 0.0
    %508 = vmatprep.subr.mxu0 0.0
    %509 = vmatpush1.xpose.msra.mxu0 0.0
    %510 = vmatprep.subr.mxu0 0.0
    %511 = vmatpush1.xpose.msra.mxu0 0.0
    %512 = vmatprep.subr.mxu0 0.0
    %513 = vmatpush1.xpose.msra.mxu0 0.0
    %514 = vmatprep.subr.mxu0 0.0
    %515 = vmatpush1.xpose.msra.mxu0 0.0
    %516 = vmatprep.subr.mxu0 0.0
    %517 = vmatpush1.xpose.msra.mxu0 0.0
    %518 = vmatprep.subr.mxu0 0.0
    %519 = vmatpush1.xpose.msra.mxu0 0.0
    %520 = vmatprep.subr.mxu0 0.0
    %521 = vmatpush1.xpose.msra.mxu0 0.0
    %522 = vmatprep.subr.mxu0 0.0
    %523 = vmatpush1.xpose.msra.mxu0 0.0
    %524 = vmatprep.subr.mxu0 0.0
    %525 = vmatpush1.xpose.msra.mxu0 0.0
    %526 = vmatprep.subr.mxu0 0.0
    %527 = vmatpush1.xpose.msra.mxu0 0.0
    %528 = vmatprep.subr.mxu0 0.0
    %529 = vmatpush1.xpose.msra.mxu0 0.0
    %530 = vmatprep.subr.mxu0 0.0
    %531 = vmatpush1.xpose.msra.mxu0 0.0
    %532 = vmatprep.subr.mxu0 0.0
    %533 = vmatpush1.xpose.msra.mxu0 0.0
    %534 = vmatprep.subr.mxu0 0.0
    %535 = vmatpush1.xpose.msra.mxu0 0.0
    %536 = vmatprep.subr.mxu0 0.0
    %537 = vmatpush1.xpose.msra.mxu0 0.0
    %538 = vmatprep.subr.mxu0 0.0
    %539 = vmatpush1.xpose.msra.mxu0 0.0
    %540 = vmatprep.subr.mxu0 0.0
    %541 = vmatpush1.xpose.msra.mxu0 0.0
    %542 = vmatprep.subr.mxu0 0.0
    %543 = vmatpush1.xpose.msra.mxu0 0.0
    %544 = vmatprep.subr.mxu0 0.0
    %545 = vmatpush1.xpose.msra.mxu0 0.0
    %546 = vmatprep.subr.mxu0 0.0
    %547 = vmatpush1.xpose.msra.mxu0 0.0
    %548 = vmatprep.subr.mxu0 0.0
    %549 = vmatpush1.xpose.msra.mxu0 0.0
    %550 = vmatprep.subr.mxu0 0.0
    %551 = vmatpush1.xpose.msra.mxu0 0.0
    %552 = vmatprep.subr.mxu0 0.0
    %553 = vmatpush1.xpose.msra.mxu0 0.0
    %554 = vmatprep.subr.mxu0 0.0
    %555 = vmatpush1.xpose.msra.mxu0 0.0
    %556 = vmatprep.subr.mxu0 0.0
    %557 = vmatpush1.xpose.msra.mxu0 0.0
    %558 = vmatprep.mubr.f32.mxu0 0.0
    %559 = vmatmul.mubr.f32.gmra.mrb[0].mxu0 %v490
    %v560 = vpop.f32.mrb[0].mxu0
    %v561 = vadd.f32 0.0, %v560
    %v562 = vpop.f32.mrb[0].mxu0
    %563 = vdwg.mxu0
    %564 = vrot.lane.b32.xlu0 %v173, 96
    %v565 = vpop.permute.xlu0 %564
    %v566 = vsel %vm185, %v173, 0
    %v568 = vsel %vm185, %v565, 0
    %570 = vmatprep.subr.mxu0 0.0
    %571 = vmatpush1.xpose.msra.mxu0 %v568
    %572 = vmatprep.subr.mxu0 0.0
    %573 = vmatpush1.xpose.msra.mxu0 0.0
    %574 = vmatprep.subr.mxu0 0.0
    %575 = vmatpush1.xpose.msra.mxu0 0.0
    %576 = vmatprep.subr.mxu0 0.0
    %577 = vmatpush1.xpose.msra.mxu0 0.0
    %578 = vmatprep.subr.mxu0 0.0
    %579 = vmatpush1.xpose.msra.mxu0 0.0
    %580 = vmatprep.subr.mxu0 0.0
    %581 = vmatpush1.xpose.msra.mxu0 0.0
    %582 = vmatprep.subr.mxu0 0.0
    %583 = vmatpush1.xpose.msra.mxu0 0.0
    %584 = vmatprep.subr.mxu0 0.0
    %585 = vmatpush1.xpose.msra.mxu0 0.0
    %586 = vmatprep.subr.mxu0 0.0
    %587 = vmatpush1.xpose.msra.mxu0 0.0
    %588 = vmatprep.subr.mxu0 0.0
    %589 = vmatpush1.xpose.msra.mxu0 0.0
    %590 = vmatprep.subr.mxu0 0.0
    %591 = vmatpush1.xpose.msra.mxu0 0.0
    %592 = vmatprep.subr.mxu0 0.0
    %593 = vmatpush1.xpose.msra.mxu0 0.0
    %594 = vmatprep.subr.mxu0 0.0
    %595 = vmatpush1.xpose.msra.mxu0 0.0
    %596 = vmatprep.subr.mxu0 0.0
    %597 = vmatpush1.xpose.msra.mxu0 0.0
    %598 = vmatprep.subr.mxu0 0.0
    %599 = vmatpush1.xpose.msra.mxu0 0.0
    %600 = vmatprep.subr.mxu0 0.0
    %601 = vmatpush1.xpose.msra.mxu0 0.0
    %602 = vmatprep.subr.mxu0 0.0
    %603 = vmatpush1.xpose.msra.mxu0 0.0
    %604 = vmatprep.subr.mxu0 0.0
    %605 = vmatpush1.xpose.msra.mxu0 0.0
    %606 = vmatprep.subr.mxu0 0.0
    %607 = vmatpush1.xpose.msra.mxu0 0.0
    %608 = vmatprep.subr.mxu0 0.0
    %609 = vmatpush1.xpose.msra.mxu0 0.0
    %610 = vmatprep.subr.mxu0 0.0
    %611 = vmatpush1.xpose.msra.mxu0 0.0
    %612 = vmatprep.subr.mxu0 0.0
    %613 = vmatpush1.xpose.msra.mxu0 0.0
    %614 = vmatprep.subr.mxu0 0.0
    %615 = vmatpush1.xpose.msra.mxu0 0.0
    %616 = vmatprep.subr.mxu0 0.0
    %617 = vmatpush1.xpose.msra.mxu0 0.0
    %618 = vmatprep.subr.mxu0 0.0
    %619 = vmatpush1.xpose.msra.mxu0 0.0
    %620 = vmatprep.subr.mxu0 0.0
    %621 = vmatpush1.xpose.msra.mxu0 0.0
    %622 = vmatprep.subr.mxu0 0.0
    %623 = vmatpush1.xpose.msra.mxu0 0.0
    %624 = vmatprep.subr.mxu0 0.0
    %625 = vmatpush1.xpose.msra.mxu0 0.0
    %626 = vmatprep.subr.mxu0 0.0
    %627 = vmatpush1.xpose.msra.mxu0 0.0
    %628 = vmatprep.subr.mxu0 0.0
    %629 = vmatpush1.xpose.msra.mxu0 0.0
    %630 = vmatprep.subr.mxu0 0.0
    %631 = vmatpush1.xpose.msra.mxu0 0.0
    %632 = vmatprep.subr.mxu0 0.0
    %633 = vmatpush1.xpose.msra.mxu0 0.0
    %634 = vmatprep.mubr.f32.mxu0 0.0
    %635 = vmatmul.mubr.f32.gmra.mrb[0].mxu0 %v566
    %v636 = vpop.f32.mrb[0].mxu0
    %v637 = vadd.f32 0.0, %v636
    %v638 = vpop.f32.mrb[0].mxu0
    %639 = vdwg.mxu0
    %640 = vrot.lane.b32.xlu0 %v175, 96
    %v641 = vpop.permute.xlu0 %640
    %v642 = vsel %vm185, %v175, 0
    %v644 = vsel %vm185, %v641, 0
    %646 = vmatprep.subr.mxu0 0.0
    %647 = vmatpush1.xpose.msra.mxu0 %v644
    %648 = vmatprep.subr.mxu0 0.0
    %649 = vmatpush1.xpose.msra.mxu0 0.0
    %650 = vmatprep.subr.mxu0 0.0
    %651 = vmatpush1.xpose.msra.mxu0 0.0
    %652 = vmatprep.subr.mxu0 0.0
    %653 = vmatpush1.xpose.msra.mxu0 0.0
    %654 = vmatprep.subr.mxu0 0.0
    %655 = vmatpush1.xpose.msra.mxu0 0.0
    %656 = vmatprep.subr.mxu0 0.0
    %657 = vmatpush1.xpose.msra.mxu0 0.0
    %658 = vmatprep.subr.mxu0 0.0
    %659 = vmatpush1.xpose.msra.mxu0 0.0
    %660 = vmatprep.subr.mxu0 0.0
    %661 = vmatpush1.xpose.msra.mxu0 0.0
    %662 = vmatprep.subr.mxu0 0.0
    %663 = vmatpush1.xpose.msra.mxu0 0.0
    %664 = vmatprep.subr.mxu0 0.0
    %665 = vmatpush1.xpose.msra.mxu0 0.0
    %666 = vmatprep.subr.mxu0 0.0
    %667 = vmatpush1.xpose.msra.mxu0 0.0
    %668 = vmatprep.subr.mxu0 0.0
    %669 = vmatpush1.xpose.msra.mxu0 0.0
    %670 = vmatprep.subr.mxu0 0.0
    %671 = vmatpush1.xpose.msra.mxu0 0.0
    %672 = vmatprep.subr.mxu0 0.0
    %673 = vmatpush1.xpose.msra.mxu0 0.0
    %674 = vmatprep.subr.mxu0 0.0
    %675 = vmatpush1.xpose.msra.mxu0 0.0
    %676 = vmatprep.subr.mxu0 0.0
    %677 = vmatpush1.xpose.msra.mxu0 0.0
    %678 = vmatprep.subr.mxu0 0.0
    %679 = vmatpush1.xpose.msra.mxu0 0.0
    %680 = vmatprep.subr.mxu0 0.0
    %681 = vmatpush1.xpose.msra.mxu0 0.0
    %682 = vmatprep.subr.mxu0 0.0
    %683 = vmatpush1.xpose.msra.mxu0 0.0
    %684 = vmatprep.subr.mxu0 0.0
    %685 = vmatpush1.xpose.msra.mxu0 0.0
    %686 = vmatprep.subr.mxu0 0.0
    %687 = vmatpush1.xpose.msra.mxu0 0.0
    %688 = vmatprep.subr.mxu0 0.0
    %689 = vmatpush1.xpose.msra.mxu0 0.0
    %690 = vmatprep.subr.mxu0 0.0
    %691 = vmatpush1.xpose.msra.mxu0 0.0
    %692 = vmatprep.subr.mxu0 0.0
    %693 = vmatpush1.xpose.msra.mxu0 0.0
    %694 = vmatprep.subr.mxu0 0.0
    %695 = vmatpush1.xpose.msra.mxu0 0.0
    %696 = vmatprep.subr.mxu0 0.0
    %697 = vmatpush1.xpose.msra.mxu0 0.0
    %698 = vmatprep.subr.mxu0 0.0
    %699 = vmatpush1.xpose.msra.mxu0 0.0
    %700 = vmatprep.subr.mxu0 0.0
    %701 = vmatpush1.xpose.msra.mxu0 0.0
    %702 = vmatprep.subr.mxu0 0.0
    %703 = vmatpush1.xpose.msra.mxu0 0.0
    %704 = vmatprep.subr.mxu0 0.0
    %705 = vmatpush1.xpose.msra.mxu0 0.0
    %706 = vmatprep.subr.mxu0 0.0
    %707 = vmatpush1.xpose.msra.mxu0 0.0
    %708 = vmatprep.subr.mxu0 0.0
    %709 = vmatpush1.xpose.msra.mxu0 0.0
    %710 = vmatprep.mubr.f32.mxu0 0.0
    %711 = vmatmul.mubr.f32.gmra.mrb[0].mxu0 %v642
    %v712 = vpop.f32.mrb[0].mxu0
    %v713 = vadd.f32 0.0, %v712
    %v714 = vpop.f32.mrb[0].mxu0
    %715 = vdwg.mxu0
    %716 = vrot.lane.b32.xlu0 %v177, 96
    %v717 = vpop.permute.xlu0 %716
    %v718 = vsel %vm185, %v177, 0
    %v720 = vsel %vm185, %v717, 0
    %722 = vmatprep.subr.mxu0 0.0
    %723 = vmatpush1.xpose.msra.mxu0 %v720
    %724 = vmatprep.subr.mxu0 0.0
    %725 = vmatpush1.xpose.msra.mxu0 0.0
    %726 = vmatprep.subr.mxu0 0.0
    %727 = vmatpush1.xpose.msra.mxu0 0.0
    %728 = vmatprep.subr.mxu0 0.0
    %729 = vmatpush1.xpose.msra.mxu0 0.0
    %730 = vmatprep.subr.mxu0 0.0
    %731 = vmatpush1.xpose.msra.mxu0 0.0
    %732 = vmatprep.subr.mxu0 0.0
    %733 = vmatpush1.xpose.msra.mxu0 0.0
    %734 = vmatprep.subr.mxu0 0.0
    %735 = vmatpush1.xpose.msra.mxu0 0.0
    %736 = vmatprep.subr.mxu0 0.0
    %737 = vmatpush1.xpose.msra.mxu0 0.0
    %738 = vmatprep.subr.mxu0 0.0
    %739 = vmatpush1.xpose.msra.mxu0 0.0
    %740 = vmatprep.subr.mxu0 0.0
    %741 = vmatpush1.xpose.msra.mxu0 0.0
    %742 = vmatprep.subr.mxu0 0.0
    %743 = vmatpush1.xpose.msra.mxu0 0.0
    %744 = vmatprep.subr.mxu0 0.0
    %745 = vmatpush1.xpose.msra.mxu0 0.0
    %746 = vmatprep.subr.mxu0 0.0
    %747 = vmatpush1.xpose.msra.mxu0 0.0
    %748 = vmatprep.subr.mxu0 0.0
    %749 = vmatpush1.xpose.msra.mxu0 0.0
    %750 = vmatprep.subr.mxu0 0.0
    %751 = vmatpush1.xpose.msra.mxu0 0.0
    %752 = vmatprep.subr.mxu0 0.0
    %753 = vmatpush1.xpose.msra.mxu0 0.0
    %754 = vmatprep.subr.mxu0 0.0
    %755 = vmatpush1.xpose.msra.mxu0 0.0
    %756 = vmatprep.subr.mxu0 0.0
    %757 = vmatpush1.xpose.msra.mxu0 0.0
    %758 = vmatprep.subr.mxu0 0.0
    %759 = vmatpush1.xpose.msra.mxu0 0.0
    %760 = vmatprep.subr.mxu0 0.0
    %761 = vmatpush1.xpose.msra.mxu0 0.0
    %762 = vmatprep.subr.mxu0 0.0
    %763 = vmatpush1.xpose.msra.mxu0 0.0
    %764 = vmatprep.subr.mxu0 0.0
    %765 = vmatpush1.xpose.msra.mxu0 0.0
    %766 = vmatprep.subr.mxu0 0.0
    %767 = vmatpush1.xpose.msra.mxu0 0.0
    %768 = vmatprep.subr.mxu0 0.0
    %769 = vmatpush1.xpose.msra.mxu0 0.0
    %770 = vmatprep.subr.mxu0 0.0
    %771 = vmatpush1.xpose.msra.mxu0 0.0
    %772 = vmatprep.subr.mxu0 0.0
    %773 = vmatpush1.xpose.msra.mxu0 0.0
    %774 = vmatprep.subr.mxu0 0.0
    %775 = vmatpush1.xpose.msra.mxu0 0.0
    %776 = vmatprep.subr.mxu0 0.0
    %777 = vmatpush1.xpose.msra.mxu0 0.0
    %778 = vmatprep.subr.mxu0 0.0
    %779 = vmatpush1.xpose.msra.mxu0 0.0
    %780 = vmatprep.subr.mxu0 0.0
    %781 = vmatpush1.xpose.msra.mxu0 0.0
    %782 = vmatprep.subr.mxu0 0.0
    %783 = vmatpush1.xpose.msra.mxu0 0.0
    %784 = vmatprep.subr.mxu0 0.0
    %785 = vmatpush1.xpose.msra.mxu0 0.0
    %786 = vmatprep.mubr.f32.mxu0 0.0
    %787 = vmatmul.mubr.f32.gmra.mrb[0].mxu0 %v718
    %v788 = vpop.f32.mrb[0].mxu0
    %v789 = vadd.f32 0.0, %v788
    %v790 = vpop.f32.mrb[0].mxu0
    %791 = vdwg.mxu0
    %v792 = vsel %vm182, 1, 0
    %vm793 = vcmp.eq.s32.totalorder %v792, 1
    %v794 = vsel %vm793, %v257, -1e+30
    %v795 = vsel %vm793, %v333, -1e+30
    %v796 = vsel %vm793, %v409, -1e+30
    %v797 = vsel %vm793, %v485, -1e+30
    %v798 = vsel %vm793, %v561, -1e+30
    %v799 = vsel %vm793, %v637, -1e+30
    %v800 = vsel %vm793, %v713, -1e+30
    %v801 = vsel %vm793, %v789, -1e+30
    %v802 = vsel %vm185, %v794, -inf
    %803 = vmax.xlane.f32.xlu0 %v802
    %v804 = vpop.xlane.xlu0 %803
    %v805 = vsel %vm185, %v795, -inf
    %806 = vmax.xlane.f32.xlu0 %v805
    %v807 = vpop.xlane.xlu0 %806
    %v808 = vsel %vm185, %v796, -inf
    %809 = vmax.xlane.f32.xlu0 %v808
    %v810 = vpop.xlane.xlu0 %809
    %v811 = vsel %vm185, %v797, -inf
    %812 = vmax.xlane.f32.xlu0 %v811
    %v813 = vpop.xlane.xlu0 %812
    %v814 = vsel %vm185, %v798, -inf
    %815 = vmax.xlane.f32.xlu0 %v814
    %v816 = vpop.xlane.xlu0 %815
    %v817 = vsel %vm185, %v799, -inf
    %818 = vmax.xlane.f32.xlu0 %v817
    %v819 = vpop.xlane.xlu0 %818
    %v820 = vsel %vm185, %v800, -inf
    %821 = vmax.xlane.f32.xlu0 %v820
    %v822 = vpop.xlane.xlu0 %821
    %v823 = vsel %vm185, %v801, -inf
    %824 = vmax.xlane.f32.xlu0 %v823
    %v825 = vpop.xlane.xlu0 %824
    %v826 = vsub.f32 %v794, %v804
    %v827 = vsub.f32 %v795, %v807
    %v828 = vsub.f32 %v796, %v810
    %v829 = vsub.f32 %v797, %v813
    %v830 = vsub.f32 %v798, %v816
    %v831 = vsub.f32 %v799, %v819
    %v832 = vsub.f32 %v800, %v822
    %v833 = vsub.f32 %v801, %v825
    %v834 = vmul.f32 %v826, 1.442695
    %v835 = vpow.pop %v834
    %v836 = vmul.f32 %v827, 1.442695
    %v837 = vpow.pop %v836
    %v838 = vmul.f32 %v828, 1.442695
    %v839 = vpow.pop %v838
    %v840 = vmul.f32 %v829, 1.442695
    %v841 = vpow.pop %v840
    %v842 = vmul.f32 %v830, 1.442695
    %v843 = vpow.pop %v842
    %v844 = vmul.f32 %v831, 1.442695
    %v845 = vpow.pop %v844
    %v846 = vmul.f32 %v832, 1.442695
    %v847 = vpow.pop %v846
    %v848 = vmul.f32 %v833, 1.442695
    %v849 = vpow.pop %v848
    %v850 = vsel %vm185, %v835, 0.0
    %851 = vadd.xlane.f32.xlu0 %v850
    %v852 = vpop.xlane.xlu0 %851
    %v853 = vsel %vm185, %v837, 0.0
    %854 = vadd.xlane.f32.xlu0 %v853
    %v855 = vpop.xlane.xlu0 %854
    %v856 = vsel %vm185, %v839, 0.0
    %857 = vadd.xlane.f32.xlu0 %v856
    %v858 = vpop.xlane.xlu0 %857
    %v859 = vsel %vm185, %v841, 0.0
    %860 = vadd.xlane.f32.xlu0 %v859
    %v861 = vpop.xlane.xlu0 %860
    %v862 = vsel %vm185, %v843, 0.0
    %863 = vadd.xlane.f32.xlu0 %v862
    %v864 = vpop.xlane.xlu0 %863
    %v865 = vsel %vm185, %v845, 0.0
    %866 = vadd.xlane.f32.xlu0 %v865
    %v867 = vpop.xlane.xlu0 %866
    %v868 = vsel %vm185, %v847, 0.0
    %869 = vadd.xlane.f32.xlu0 %v868
    %v870 = vpop.xlane.xlu0 %869
    %v871 = vsel %vm185, %v849, 0.0
    %872 = vadd.xlane.f32.xlu0 %v871
    %v873 = vpop.xlane.xlu0 %872
    %v874 = vrcp.pop %v852
    %v875 = vrcp.pop %v855
    %v876 = vrcp.pop %v858
    %v877 = vrcp.pop %v861
    %v878 = vrcp.pop %v864
    %v879 = vrcp.pop %v867
    %v880 = vrcp.pop %v870
    %v881 = vrcp.pop %v873
    %v882 = vmul.f32 %v835, %v874
    %v883 = vmul.f32 %v837, %v875
    %v884 = vmul.f32 %v839, %v876
    %v885 = vmul.f32 %v841, %v877
    %v886 = vmul.f32 %v843, %v878
    %v887 = vmul.f32 %v845, %v879
    %v888 = vmul.f32 %v847, %v880
    %v889 = vmul.f32 %v849, %v881
    %890 = vrot.lane.b32.xlu0 %v156, 64
    %v891 = vpop.permute.xlu0 %890
    %v894 = vsel %vm185, %v882, 0
    %896 = vmatprep.subr.mxu0 0.0
    %897 = vmatpush1.msra.mxu0 %v891
    %898 = vmatprep.subr.mxu0 0.0
    %899 = vmatpush1.msra.mxu0 0.0
    %900 = vmatprep.subr.mxu0 0.0
    %901 = vmatpush1.msra.mxu0 0.0
    %902 = vmatprep.subr.mxu0 0.0
    %903 = vmatpush1.msra.mxu0 0.0
    %904 = vmatprep.subr.mxu0 0.0
    %905 = vmatpush1.msra.mxu0 0.0
    %906 = vmatprep.subr.mxu0 0.0
    %907 = vmatpush1.msra.mxu0 0.0
    %908 = vmatprep.subr.mxu0 0.0
    %909 = vmatpush1.msra.mxu0 0.0
    %910 = vmatprep.subr.mxu0 0.0
    %911 = vmatpush1.msra.mxu0 0.0
    %912 = vmatprep.subr.mxu0 0.0
    %913 = vmatpush1.msra.mxu0 0.0
    %914 = vmatprep.subr.mxu0 0.0
    %915 = vmatpush1.msra.mxu0 0.0
    %916 = vmatprep.subr.mxu0 0.0
    %917 = vmatpush1.msra.mxu0 0.0
    %918 = vmatprep.subr.mxu0 0.0
    %919 = vmatpush1.msra.mxu0 0.0
    %920 = vmatprep.subr.mxu0 0.0
    %921 = vmatpush1.msra.mxu0 0.0
    %922 = vmatprep.subr.mxu0 0.0
    %923 = vmatpush1.msra.mxu0 0.0
    %924 = vmatprep.subr.mxu0 0.0
    %925 = vmatpush1.msra.mxu0 0.0
    %926 = vmatprep.subr.mxu0 0.0
    %927 = vmatpush1.msra.mxu0 0.0
    %928 = vmatprep.subr.mxu0 0.0
    %929 = vmatpush1.msra.mxu0 0.0
    %930 = vmatprep.subr.mxu0 0.0
    %931 = vmatpush1.msra.mxu0 0.0
    %932 = vmatprep.subr.mxu0 0.0
    %933 = vmatpush1.msra.mxu0 0.0
    %934 = vmatprep.subr.mxu0 0.0
    %935 = vmatpush1.msra.mxu0 0.0
    %936 = vmatprep.subr.mxu0 0.0
    %937 = vmatpush1.msra.mxu0 0.0
    %938 = vmatprep.subr.mxu0 0.0
    %939 = vmatpush1.msra.mxu0 0.0
    %940 = vmatprep.subr.mxu0 0.0
    %941 = vmatpush1.msra.mxu0 0.0
    %942 = vmatprep.subr.mxu0 0.0
    %943 = vmatpush1.msra.mxu0 0.0
    %944 = vmatprep.subr.mxu0 0.0
    %945 = vmatpush1.msra.mxu0 0.0
    %946 = vmatprep.subr.mxu0 0.0
    %947 = vmatpush1.msra.mxu0 0.0
    %948 = vmatprep.subr.mxu0 0.0
    %949 = vmatpush1.msra.mxu0 0.0
    %950 = vmatprep.subr.mxu0 0.0
    %951 = vmatpush1.msra.mxu0 0.0
    %952 = vmatprep.subr.mxu0 0.0
    %953 = vmatpush1.msra.mxu0 0.0
    %954 = vmatprep.subr.mxu0 0.0
    %955 = vmatpush1.msra.mxu0 0.0
    %956 = vmatprep.subr.mxu0 0.0
    %957 = vmatpush1.msra.mxu0 0.0
    %958 = vmatprep.subr.mxu0 0.0
    %959 = vmatpush1.msra.mxu0 0.0
    %960 = vmatprep.mubr.f32.mxu0 0.0
    %961 = vmatmul.mubr.f32.gmra.mrb[0].mxu0 %v894
    %v962 = vpop.f32.mrb[0].mxu0
    %v963 = vadd.f32 0.0, %v962
    %v964 = vpop.f32.mrb[0].mxu0
    %965 = vdwg.mxu0
    %966 = vrot.lane.b32.xlu0 %v161, 64
    %v967 = vpop.permute.xlu0 %966
    %v970 = vsel %vm185, %v883, 0
    %972 = vmatprep.subr.mxu0 0.0
    %973 = vmatpush1.msra.mxu0 %v967
    %974 = vmatprep.subr.mxu0 0.0
    %975 = vmatpush1.msra.mxu0 0.0
    %976 = vmatprep.subr.mxu0 0.0
    %977 = vmatpush1.msra.mxu0 0.0
    %978 = vmatprep.subr.mxu0 0.0
    %979 = vmatpush1.msra.mxu0 0.0
    %980 = vmatprep.subr.mxu0 0.0
    %981 = vmatpush1.msra.mxu0 0.0
    %982 = vmatprep.subr.mxu0 0.0
    %983 = vmatpush1.msra.mxu0 0.0
    %984 = vmatprep.subr.mxu0 0.0
    %985 = vmatpush1.msra.mxu0 0.0
    %986 = vmatprep.subr.mxu0 0.0
    %987 = vmatpush1.msra.mxu0 0.0
    %988 = vmatprep.subr.mxu0 0.0
    %989 = vmatpush1.msra.mxu0 0.0
    %990 = vmatprep.subr.mxu0 0.0
    %991 = vmatpush1.msra.mxu0 0.0
    %992 = vmatprep.subr.mxu0 0.0
    %993 = vmatpush1.msra.mxu0 0.0
    %994 = vmatprep.subr.mxu0 0.0
    %995 = vmatpush1.msra.mxu0 0.0
    %996 = vmatprep.subr.mxu0 0.0
    %997 = vmatpush1.msra.mxu0 0.0
    %998 = vmatprep.subr.mxu0 0.0
    %999 = vmatpush1.msra.mxu0 0.0
    %1000 = vmatprep.subr.mxu0 0.0
    %1001 = vmatpush1.msra.mxu0 0.0
    %1002 = vmatprep.subr.mxu0 0.0
    %1003 = vmatpush1.msra.mxu0 0.0
    %1004 = vmatprep.subr.mxu0 0.0
    %1005 = vmatpush1.msra.mxu0 0.0
    %1006 = vmatprep.subr.mxu0 0.0
    %1007 = vmatpush1.msra.mxu0 0.0
    %1008 = vmatprep.subr.mxu0 0.0
    %1009 = vmatpush1.msra.mxu0 0.0
    %1010 = vmatprep.subr.mxu0 0.0
    %1011 = vmatpush1.msra.mxu0 0.0
    %1012 = vmatprep.subr.mxu0 0.0
    %1013 = vmatpush1.msra.mxu0 0.0
    %1014 = vmatprep.subr.mxu0 0.0
    %1015 = vmatpush1.msra.mxu0 0.0
    %1016 = vmatprep.subr.mxu0 0.0
    %1017 = vmatpush1.msra.mxu0 0.0
    %1018 = vmatprep.subr.mxu0 0.0
    %1019 = vmatpush1.msra.mxu0 0.0
    %1020 = vmatprep.subr.mxu0 0.0
    %1021 = vmatpush1.msra.mxu0 0.0
    %1022 = vmatprep.subr.mxu0 0.0
    %1023 = vmatpush1.msra.mxu0 0.0
    %1024 = vmatprep.subr.mxu0 0.0
    %1025 = vmatpush1.msra.mxu0 0.0
    %1026 = vmatprep.subr.mxu0 0.0
    %1027 = vmatpush1.msra.mxu0 0.0
    %1028 = vmatprep.subr.mxu0 0.0
    %1029 = vmatpush1.msra.mxu0 0.0
    %1030 = vmatprep.subr.mxu0 0.0
    %1031 = vmatpush1.msra.mxu0 0.0
    %1032 = vmatprep.subr.mxu0 0.0
    %1033 = vmatpush1.msra.mxu0 0.0
    %1034 = vmatprep.subr.mxu0 0.0
    %1035 = vmatpush1.msra.mxu0 0.0
    %1036 = vmatprep.mubr.f32.mxu0 0.0
    %1037 = vmatmul.mubr.f32.gmra.mrb[0].mxu0 %v970
    %v1038 = vpop.f32.mrb[0].mxu0
    %v1039 = vadd.f32 0.0, %v1038
    %v1040 = vpop.f32.mrb[0].mxu0
    %1041 = vdwg.mxu0
    %1042 = vrot.lane.b32.xlu0 %v167, 64
    %v1043 = vpop.permute.xlu0 %1042
    %v1046 = vsel %vm185, %v884, 0
    %1048 = vmatprep.subr.mxu0 0.0
    %1049 = vmatpush1.msra.mxu0 %v1043
    %1050 = vmatprep.subr.mxu0 0.0
    %1051 = vmatpush1.msra.mxu0 0.0
    %1052 = vmatprep.subr.mxu0 0.0
    %1053 = vmatpush1.msra.mxu0 0.0
    %1054 = vmatprep.subr.mxu0 0.0
    %1055 = vmatpush1.msra.mxu0 0.0
    %1056 = vmatprep.subr.mxu0 0.0
    %1057 = vmatpush1.msra.mxu0 0.0
    %1058 = vmatprep.subr.mxu0 0.0
    %1059 = vmatpush1.msra.mxu0 0.0
    %1060 = vmatprep.subr.mxu0 0.0
    %1061 = vmatpush1.msra.mxu0 0.0
    %1062 = vmatprep.subr.mxu0 0.0
    %1063 = vmatpush1.msra.mxu0 0.0
    %1064 = vmatprep.subr.mxu0 0.0
    %1065 = vmatpush1.msra.mxu0 0.0
    %1066 = vmatprep.subr.mxu0 0.0
    %1067 = vmatpush1.msra.mxu0 0.0
    %1068 = vmatprep.subr.mxu0 0.0
    %1069 = vmatpush1.msra.mxu0 0.0
    %1070 = vmatprep.subr.mxu0 0.0
    %1071 = vmatpush1.msra.mxu0 0.0
    %1072 = vmatprep.subr.mxu0 0.0
    %1073 = vmatpush1.msra.mxu0 0.0
    %1074 = vmatprep.subr.mxu0 0.0
    %1075 = vmatpush1.msra.mxu0 0.0
    %1076 = vmatprep.subr.mxu0 0.0
    %1077 = vmatpush1.msra.mxu0 0.0
    %1078 = vmatprep.subr.mxu0 0.0
    %1079 = vmatpush1.msra.mxu0 0.0
    %1080 = vmatprep.subr.mxu0 0.0
    %1081 = vmatpush1.msra.mxu0 0.0
    %1082 = vmatprep.subr.mxu0 0.0
    %1083 = vmatpush1.msra.mxu0 0.0
    %1084 = vmatprep.subr.mxu0 0.0
    %1085 = vmatpush1.msra.mxu0 0.0
    %1086 = vmatprep.subr.mxu0 0.0
    %1087 = vmatpush1.msra.mxu0 0.0
    %1088 = vmatprep.subr.mxu0 0.0
    %1089 = vmatpush1.msra.mxu0 0.0
    %1090 = vmatprep.subr.mxu0 0.0
    %1091 = vmatpush1.msra.mxu0 0.0
    %1092 = vmatprep.subr.mxu0 0.0
    %1093 = vmatpush1.msra.mxu0 0.0
    %1094 = vmatprep.subr.mxu0 0.0
    %1095 = vmatpush1.msra.mxu0 0.0
    %1096 = vmatprep.subr.mxu0 0.0
    %1097 = vmatpush1.msra.mxu0 0.0
    %1098 = vmatprep.subr.mxu0 0.0
    %1099 = vmatpush1.msra.mxu0 0.0
    %1100 = vmatprep.subr.mxu0 0.0
    %1101 = vmatpush1.msra.mxu0 0.0
    %1102 = vmatprep.subr.mxu0 0.0
    %1103 = vmatpush1.msra.mxu0 0.0
    %1104 = vmatprep.subr.mxu0 0.0
    %1105 = vmatpush1.msra.mxu0 0.0
    %1106 = vmatprep.subr.mxu0 0.0
    %1107 = vmatpush1.msra.mxu0 0.0
    %1108 = vmatprep.subr.mxu0 0.0
    %1109 = vmatpush1.msra.mxu0 0.0
    %1110 = vmatprep.subr.mxu0 0.0
    %1111 = vmatpush1.msra.mxu0 0.0
    %1112 = vmatprep.mubr.f32.mxu0 0.0
    %1113 = vmatmul.mubr.f32.gmra.mrb[0].mxu0 %v1046
    %v1114 = vpop.f32.mrb[0].mxu0
    %v1115 = vadd.f32 0.0, %v1114
    %v1116 = vpop.f32.mrb[0].mxu0
    %1117 = vdwg.mxu0
    %1118 = vrot.lane.b32.xlu0 %v169, 64
    %v1119 = vpop.permute.xlu0 %1118
    %v1122 = vsel %vm185, %v885, 0
    %1124 = vmatprep.subr.mxu0 0.0
    %1125 = vmatpush1.msra.mxu0 %v1119
    %1126 = vmatprep.subr.mxu0 0.0
    %1127 = vmatpush1.msra.mxu0 0.0
    %1128 = vmatprep.subr.mxu0 0.0
    %1129 = vmatpush1.msra.mxu0 0.0
    %1130 = vmatprep.subr.mxu0 0.0
    %1131 = vmatpush1.msra.mxu0 0.0
    %1132 = vmatprep.subr.mxu0 0.0
    %1133 = vmatpush1.msra.mxu0 0.0
    %1134 = vmatprep.subr.mxu0 0.0
    %1135 = vmatpush1.msra.mxu0 0.0
    %1136 = vmatprep.subr.mxu0 0.0
    %1137 = vmatpush1.msra.mxu0 0.0
    %1138 = vmatprep.subr.mxu0 0.0
    %1139 = vmatpush1.msra.mxu0 0.0
    %1140 = vmatprep.subr.mxu0 0.0
    %1141 = vmatpush1.msra.mxu0 0.0
    %1142 = vmatprep.subr.mxu0 0.0
    %1143 = vmatpush1.msra.mxu0 0.0
    %1144 = vmatprep.subr.mxu0 0.0
    %1145 = vmatpush1.msra.mxu0 0.0
    %1146 = vmatprep.subr.mxu0 0.0
    %1147 = vmatpush1.msra.mxu0 0.0
    %1148 = vmatprep.subr.mxu0 0.0
    %1149 = vmatpush1.msra.mxu0 0.0
    %1150 = vmatprep.subr.mxu0 0.0
    %1151 = vmatpush1.msra.mxu0 0.0
    %1152 = vmatprep.subr.mxu0 0.0
    %1153 = vmatpush1.msra.mxu0 0.0
    %1154 = vmatprep.subr.mxu0 0.0
    %1155 = vmatpush1.msra.mxu0 0.0
    %1156 = vmatprep.subr.mxu0 0.0
    %1157 = vmatpush1.msra.mxu0 0.0
    %1158 = vmatprep.subr.mxu0 0.0
    %1159 = vmatpush1.msra.mxu0 0.0
    %1160 = vmatprep.subr.mxu0 0.0
    %1161 = vmatpush1.msra.mxu0 0.0
    %1162 = vmatprep.subr.mxu0 0.0
    %1163 = vmatpush1.msra.mxu0 0.0
    %1164 = vmatprep.subr.mxu0 0.0
    %1165 = vmatpush1.msra.mxu0 0.0
    %1166 = vmatprep.subr.mxu0 0.0
    %1167 = vmatpush1.msra.mxu0 0.0
    %1168 = vmatprep.subr.mxu0 0.0
    %1169 = vmatpush1.msra.mxu0 0.0
    %1170 = vmatprep.subr.mxu0 0.0
    %1171 = vmatpush1.msra.mxu0 0.0
    %1172 = vmatprep.subr.mxu0 0.0
    %1173 = vmatpush1.msra.mxu0 0.0
    %1174 = vmatprep.subr.mxu0 0.0
    %1175 = vmatpush1.msra.mxu0 0.0
    %1176 = vmatprep.subr.mxu0 0.0
    %1177 = vmatpush1.msra.mxu0 0.0
    %1178 = vmatprep.subr.mxu0 0.0
    %1179 = vmatpush1.msra.mxu0 0.0
    %1180 = vmatprep.subr.mxu0 0.0
    %1181 = vmatpush1.msra.mxu0 0.0
    %1182 = vmatprep.subr.mxu0 0.0
    %1183 = vmatpush1.msra.mxu0 0.0
    %1184 = vmatprep.subr.mxu0 0.0
    %1185 = vmatpush1.msra.mxu0 0.0
    %1186 = vmatprep.subr.mxu0 0.0
    %1187 = vmatpush1.msra.mxu0 0.0
    %1188 = vmatprep.mubr.f32.mxu0 0.0
    %1189 = vmatmul.mubr.f32.gmra.mrb[0].mxu0 %v1122
    %v1190 = vpop.f32.mrb[0].mxu0
    %v1191 = vadd.f32 0.0, %v1190
    %v1192 = vpop.f32.mrb[0].mxu0
    %1193 = vdwg.mxu0
    %1194 = vrot.lane.b32.xlu0 %v171, 64
    %v1195 = vpop.permute.xlu0 %1194
    %v1198 = vsel %vm185, %v886, 0
    %1200 = vmatprep.subr.mxu0 0.0
    %1201 = vmatpush1.msra.mxu0 %v1195
    %1202 = vmatprep.subr.mxu0 0.0
    %1203 = vmatpush1.msra.mxu0 0.0
    %1204 = vmatprep.subr.mxu0 0.0
    %1205 = vmatpush1.msra.mxu0 0.0
    %1206 = vmatprep.subr.mxu0 0.0
    %1207 = vmatpush1.msra.mxu0 0.0
    %1208 = vmatprep.subr.mxu0 0.0
    %1209 = vmatpush1.msra.mxu0 0.0
    %1210 = vmatprep.subr.mxu0 0.0
    %1211 = vmatpush1.msra.mxu0 0.0
    %1212 = vmatprep.subr.mxu0 0.0
    %1213 = vmatpush1.msra.mxu0 0.0
    %1214 = vmatprep.subr.mxu0 0.0
    %1215 = vmatpush1.msra.mxu0 0.0
    %1216 = vmatprep.subr.mxu0 0.0
    %1217 = vmatpush1.msra.mxu0 0.0
    %1218 = vmatprep.subr.mxu0 0.0
    %1219 = vmatpush1.msra.mxu0 0.0
    %1220 = vmatprep.subr.mxu0 0.0
    %1221 = vmatpush1.msra.mxu0 0.0
    %1222 = vmatprep.subr.mxu0 0.0
    %1223 = vmatpush1.msra.mxu0 0.0
    %1224 = vmatprep.subr.mxu0 0.0
    %1225 = vmatpush1.msra.mxu0 0.0
    %1226 = vmatprep.subr.mxu0 0.0
    %1227 = vmatpush1.msra.mxu0 0.0
    %1228 = vmatprep.subr.mxu0 0.0
    %1229 = vmatpush1.msra.mxu0 0.0
    %1230 = vmatprep.subr.mxu0 0.0
    %1231 = vmatpush1.msra.mxu0 0.0
    %1232 = vmatprep.subr.mxu0 0.0
    %1233 = vmatpush1.msra.mxu0 0.0
    %1234 = vmatprep.subr.mxu0 0.0
    %1235 = vmatpush1.msra.mxu0 0.0
    %1236 = vmatprep.subr.mxu0 0.0
    %1237 = vmatpush1.msra.mxu0 0.0
    %1238 = vmatprep.subr.mxu0 0.0
    %1239 = vmatpush1.msra.mxu0 0.0
    %1240 = vmatprep.subr.mxu0 0.0
    %1241 = vmatpush1.msra.mxu0 0.0
    %1242 = vmatprep.subr.mxu0 0.0
    %1243 = vmatpush1.msra.mxu0 0.0
    %1244 = vmatprep.subr.mxu0 0.0
    %1245 = vmatpush1.msra.mxu0 0.0
    %1246 = vmatprep.subr.mxu0 0.0
    %1247 = vmatpush1.msra.mxu0 0.0
    %1248 = vmatprep.subr.mxu0 0.0
    %1249 = vmatpush1.msra.mxu0 0.0
    %1250 = vmatprep.subr.mxu0 0.0
    %1251 = vmatpush1.msra.mxu0 0.0
    %1252 = vmatprep.subr.mxu0 0.0
    %1253 = vmatpush1.msra.mxu0 0.0
    %1254 = vmatprep.subr.mxu0 0.0
    %1255 = vmatpush1.msra.mxu0 0.0
    %1256 = vmatprep.subr.mxu0 0.0
    %1257 = vmatpush1.msra.mxu0 0.0
    %1258 = vmatprep.subr.mxu0 0.0
    %1259 = vmatpush1.msra.mxu0 0.0
    %1260 = vmatprep.subr.mxu0 0.0
    %1261 = vmatpush1.msra.mxu0 0.0
    %1262 = vmatprep.subr.mxu0 0.0
    %1263 = vmatpush1.msra.mxu0 0.0
    %1264 = vmatprep.mubr.f32.mxu0 0.0
    %1265 = vmatmul.mubr.f32.gmra.mrb[0].mxu0 %v1198
    %v1266 = vpop.f32.mrb[0].mxu0
    %v1267 = vadd.f32 0.0, %v1266
    %v1268 = vpop.f32.mrb[0].mxu0
    %1269 = vdwg.mxu0
    %1270 = vrot.lane.b32.xlu0 %v173, 64
    %v1271 = vpop.permute.xlu0 %1270
    %v1274 = vsel %vm185, %v887, 0
    %1276 = vmatprep.subr.mxu0 0.0
    %1277 = vmatpush1.msra.mxu0 %v1271
    %1278 = vmatprep.subr.mxu0 0.0
    %1279 = vmatpush1.msra.mxu0 0.0
    %1280 = vmatprep.subr.mxu0 0.0
    %1281 = vmatpush1.msra.mxu0 0.0
    %1282 = vmatprep.subr.mxu0 0.0
    %1283 = vmatpush1.msra.mxu0 0.0
    %1284 = vmatprep.subr.mxu0 0.0
    %1285 = vmatpush1.msra.mxu0 0.0
    %1286 = vmatprep.subr.mxu0 0.0
    %1287 = vmatpush1.msra.mxu0 0.0
    %1288 = vmatprep.subr.mxu0 0.0
    %1289 = vmatpush1.msra.mxu0 0.0
    %1290 = vmatprep.subr.mxu0 0.0
    %1291 = vmatpush1.msra.mxu0 0.0
    %1292 = vmatprep.subr.mxu0 0.0
    %1293 = vmatpush1.msra.mxu0 0.0
    %1294 = vmatprep.subr.mxu0 0.0
    %1295 = vmatpush1.msra.mxu0 0.0
    %1296 = vmatprep.subr.mxu0 0.0
    %1297 = vmatpush1.msra.mxu0 0.0
    %1298 = vmatprep.subr.mxu0 0.0
    %1299 = vmatpush1.msra.mxu0 0.0
    %1300 = vmatprep.subr.mxu0 0.0
    %1301 = vmatpush1.msra.mxu0 0.0
    %1302 = vmatprep.subr.mxu0 0.0
    %1303 = vmatpush1.msra.mxu0 0.0
    %1304 = vmatprep.subr.mxu0 0.0
    %1305 = vmatpush1.msra.mxu0 0.0
    %1306 = vmatprep.subr.mxu0 0.0
    %1307 = vmatpush1.msra.mxu0 0.0
    %1308 = vmatprep.subr.mxu0 0.0
    %1309 = vmatpush1.msra.mxu0 0.0
    %1310 = vmatprep.subr.mxu0 0.0
    %1311 = vmatpush1.msra.mxu0 0.0
    %1312 = vmatprep.subr.mxu0 0.0
    %1313 = vmatpush1.msra.mxu0 0.0
    %1314 = vmatprep.subr.mxu0 0.0
    %1315 = vmatpush1.msra.mxu0 0.0
    %1316 = vmatprep.subr.mxu0 0.0
    %1317 = vmatpush1.msra.mxu0 0.0
    %1318 = vmatprep.subr.mxu0 0.0
    %1319 = vmatpush1.msra.mxu0 0.0
    %1320 = vmatprep.subr.mxu0 0.0
    %1321 = vmatpush1.msra.mxu0 0.0
    %1322 = vmatprep.subr.mxu0 0.0
    %1323 = vmatpush1.msra.mxu0 0.0
    %1324 = vmatprep.subr.mxu0 0.0
    %1325 = vmatpush1.msra.mxu0 0.0
    %1326 = vmatprep.subr.mxu0 0.0
    %1327 = vmatpush1.msra.mxu0 0.0
    %1328 = vmatprep.subr.mxu0 0.0
    %1329 = vmatpush1.msra.mxu0 0.0
    %1330 = vmatprep.subr.mxu0 0.0
    %1331 = vmatpush1.msra.mxu0 0.0
    %1332 = vmatprep.subr.mxu0 0.0
    %1333 = vmatpush1.msra.mxu0 0.0
    %1334 = vmatprep.subr.mxu0 0.0
    %1335 = vmatpush1.msra.mxu0 0.0
    %1336 = vmatprep.subr.mxu0 0.0
    %1337 = vmatpush1.msra.mxu0 0.0
    %1338 = vmatprep.subr.mxu0 0.0
    %1339 = vmatpush1.msra.mxu0 0.0
    %1340 = vmatprep.mubr.f32.mxu0 0.0
    %1341 = vmatmul.mubr.f32.gmra.mrb[0].mxu0 %v1274
    %v1342 = vpop.f32.mrb[0].mxu0
    %v1343 = vadd.f32 0.0, %v1342
    %v1344 = vpop.f32.mrb[0].mxu0
    %1345 = vdwg.mxu0
    %1346 = vrot.lane.b32.xlu0 %v175, 64
    %v1347 = vpop.permute.xlu0 %1346
    %v1350 = vsel %vm185, %v888, 0
    %1352 = vmatprep.subr.mxu0 0.0
    %1353 = vmatpush1.msra.mxu0 %v1347
    %1354 = vmatprep.subr.mxu0 0.0
    %1355 = vmatpush1.msra.mxu0 0.0
    %1356 = vmatprep.subr.mxu0 0.0
    %1357 = vmatpush1.msra.mxu0 0.0
    %1358 = vmatprep.subr.mxu0 0.0
    %1359 = vmatpush1.msra.mxu0 0.0
    %1360 = vmatprep.subr.mxu0 0.0
    %1361 = vmatpush1.msra.mxu0 0.0
    %1362 = vmatprep.subr.mxu0 0.0
    %1363 = vmatpush1.msra.mxu0 0.0
    %1364 = vmatprep.subr.mxu0 0.0
    %1365 = vmatpush1.msra.mxu0 0.0
    %1366 = vmatprep.subr.mxu0 0.0
    %1367 = vmatpush1.msra.mxu0 0.0
    %1368 = vmatprep.subr.mxu0 0.0
    %1369 = vmatpush1.msra.mxu0 0.0
    %1370 = vmatprep.subr.mxu0 0.0
    %1371 = vmatpush1.msra.mxu0 0.0
    %1372 = vmatprep.subr.mxu0 0.0
    %1373 = vmatpush1.msra.mxu0 0.0
    %1374 = vmatprep.subr.mxu0 0.0
    %1375 = vmatpush1.msra.mxu0 0.0
    %1376 = vmatprep.subr.mxu0 0.0
    %1377 = vmatpush1.msra.mxu0 0.0
    %1378 = vmatprep.subr.mxu0 0.0
    %1379 = vmatpush1.msra.mxu0 0.0
    %1380 = vmatprep.subr.mxu0 0.0
    %1381 = vmatpush1.msra.mxu0 0.0
    %1382 = vmatprep.subr.mxu0 0.0
    %1383 = vmatpush1.msra.mxu0 0.0
    %1384 = vmatprep.subr.mxu0 0.0
    %1385 = vmatpush1.msra.mxu0 0.0
    %1386 = vmatprep.subr.mxu0 0.0
    %1387 = vmatpush1.msra.mxu0 0.0
    %1388 = vmatprep.subr.mxu0 0.0
    %1389 = vmatpush1.msra.mxu0 0.0
    %1390 = vmatprep.subr.mxu0 0.0
    %1391 = vmatpush1.msra.mxu0 0.0
    %1392 = vmatprep.subr.mxu0 0.0
    %1393 = vmatpush1.msra.mxu0 0.0
    %1394 = vmatprep.subr.mxu0 0.0
    %1395 = vmatpush1.msra.mxu0 0.0
    %1396 = vmatprep.subr.mxu0 0.0
    %1397 = vmatpush1.msra.mxu0 0.0
    %1398 = vmatprep.subr.mxu0 0.0
    %1399 = vmatpush1.msra.mxu0 0.0
    %1400 = vmatprep.subr.mxu0 0.0
    %1401 = vmatpush1.msra.mxu0 0.0
    %1402 = vmatprep.subr.mxu0 0.0
    %1403 = vmatpush1.msra.mxu0 0.0
    %1404 = vmatprep.subr.mxu0 0.0
    %1405 = vmatpush1.msra.mxu0 0.0
    %1406 = vmatprep.subr.mxu0 0.0
    %1407 = vmatpush1.msra.mxu0 0.0
    %1408 = vmatprep.subr.mxu0 0.0
    %1409 = vmatpush1.msra.mxu0 0.0
    %1410 = vmatprep.subr.mxu0 0.0
    %1411 = vmatpush1.msra.mxu0 0.0
    %1412 = vmatprep.subr.mxu0 0.0
    %1413 = vmatpush1.msra.mxu0 0.0
    %1414 = vmatprep.subr.mxu0 0.0
    %1415 = vmatpush1.msra.mxu0 0.0
    %1416 = vmatprep.mubr.f32.mxu0 0.0
    %1417 = vmatmul.mubr.f32.gmra.mrb[0].mxu0 %v1350
    %v1418 = vpop.f32.mrb[0].mxu0
    %v1419 = vadd.f32 0.0, %v1418
    %v1420 = vpop.f32.mrb[0].mxu0
    %1421 = vdwg.mxu0
    %1422 = vrot.lane.b32.xlu0 %v177, 64
    %v1423 = vpop.permute.xlu0 %1422
    %v1426 = vsel %vm185, %v889, 0
    %1428 = vmatprep.subr.mxu0 0.0
    %1429 = vmatpush1.msra.mxu0 %v1423
    %1430 = vmatprep.subr.mxu0 0.0
    %1431 = vmatpush1.msra.mxu0 0.0
    %1432 = vmatprep.subr.mxu0 0.0
    %1433 = vmatpush1.msra.mxu0 0.0
    %1434 = vmatprep.subr.mxu0 0.0
    %1435 = vmatpush1.msra.mxu0 0.0
    %1436 = vmatprep.subr.mxu0 0.0
    %1437 = vmatpush1.msra.mxu0 0.0
    %1438 = vmatprep.subr.mxu0 0.0
    %1439 = vmatpush1.msra.mxu0 0.0
    %1440 = vmatprep.subr.mxu0 0.0
    %1441 = vmatpush1.msra.mxu0 0.0
    %1442 = vmatprep.subr.mxu0 0.0
    %1443 = vmatpush1.msra.mxu0 0.0
    %1444 = vmatprep.subr.mxu0 0.0
    %1445 = vmatpush1.msra.mxu0 0.0
    %1446 = vmatprep.subr.mxu0 0.0
    %1447 = vmatpush1.msra.mxu0 0.0
    %1448 = vmatprep.subr.mxu0 0.0
    %1449 = vmatpush1.msra.mxu0 0.0
    %1450 = vmatprep.subr.mxu0 0.0
    %1451 = vmatpush1.msra.mxu0 0.0
    %1452 = vmatprep.subr.mxu0 0.0
    %1453 = vmatpush1.msra.mxu0 0.0
    %1454 = vmatprep.subr.mxu0 0.0
    %1455 = vmatpush1.msra.mxu0 0.0
    %1456 = vmatprep.subr.mxu0 0.0
    %1457 = vmatpush1.msra.mxu0 0.0
    %1458 = vmatprep.subr.mxu0 0.0
    %1459 = vmatpush1.msra.mxu0 0.0
    %1460 = vmatprep.subr.mxu0 0.0
    %1461 = vmatpush1.msra.mxu0 0.0
    %1462 = vmatprep.subr.mxu0 0.0
    %1463 = vmatpush1.msra.mxu0 0.0
    %1464 = vmatprep.subr.mxu0 0.0
    %1465 = vmatpush1.msra.mxu0 0.0
    %1466 = vmatprep.subr.mxu0 0.0
    %1467 = vmatpush1.msra.mxu0 0.0
    %1468 = vmatprep.subr.mxu0 0.0
    %1469 = vmatpush1.msra.mxu0 0.0
    %1470 = vmatprep.subr.mxu0 0.0
    %1471 = vmatpush1.msra.mxu0 0.0
    %1472 = vmatprep.subr.mxu0 0.0
    %1473 = vmatpush1.msra.mxu0 0.0
    %1474 = vmatprep.subr.mxu0 0.0
    %1475 = vmatpush1.msra.mxu0 0.0
    %1476 = vmatprep.subr.mxu0 0.0
    %1477 = vmatpush1.msra.mxu0 0.0
    %1478 = vmatprep.subr.mxu0 0.0
    %1479 = vmatpush1.msra.mxu0 0.0
    %1480 = vmatprep.subr.mxu0 0.0
    %1481 = vmatpush1.msra.mxu0 0.0
    %1482 = vmatprep.subr.mxu0 0.0
    %1483 = vmatpush1.msra.mxu0 0.0
    %1484 = vmatprep.subr.mxu0 0.0
    %1485 = vmatpush1.msra.mxu0 0.0
    %1486 = vmatprep.subr.mxu0 0.0
    %1487 = vmatpush1.msra.mxu0 0.0
    %1488 = vmatprep.subr.mxu0 0.0
    %1489 = vmatpush1.msra.mxu0 0.0
    %1490 = vmatprep.subr.mxu0 0.0
    %1491 = vmatpush1.msra.mxu0 0.0
    %1492 = vmatprep.mubr.f32.mxu0 0.0
    %1493 = vmatmul.mubr.f32.gmra.mrb[0].mxu0 %v1426
    %v1494 = vpop.f32.mrb[0].mxu0
    %v1495 = vadd.f32 0.0, %v1494
    %v1496 = vpop.f32.mrb[0].mxu0
    %1497 = vdwg.mxu0
    %1500 = vrot.lane.b32.xlu0 %v1115, 8
    %v1501 = vpop.permute.xlu0 %1500
    %1502 = vrot.lane.b32.xlu0 %v1191, 8
    %v1503 = vpop.permute.xlu0 %1502
    %1508 = vrot.lane.b32.xlu0 %v1267, 16
    %v1509 = vpop.permute.xlu0 %1508
    %1510 = vrot.lane.b32.xlu0 %v1343, 16
    %v1511 = vpop.permute.xlu0 %1510
    %1516 = vrot.lane.b32.xlu0 %v1419, 24
    %v1517 = vpop.permute.xlu0 %1516
    %1518 = vrot.lane.b32.xlu0 %v1495, 24
    %v1519 = vpop.permute.xlu0 %1518
    %v1522 = vsel %vm185, %v963, %v1501
    %v1523 = vsel %vm185, %v1039, %v1503
    %vm1524 = vcmask 130048
    %v1525 = vsel %vm1524, %v1522, %v1509
    %v1526 = vsel %vm1524, %v1523, %v1511
    %vm1527 = vcmask 195584
    %v1528 = vsel %vm1527, %v1525, %v1517
    %v1529 = vsel %vm1527, %v1526, %v1519
    %v1530 = vld [vmem:[%s2] sm:$0xff]
    %v1531 = vld [vmem:[%s2 + $0x8] sm:$0xff]
    %v1532 = vld [vmem:[%s2 + $0x10] sm:$0xff]
    %v1533 = vld [vmem:[%s2 + $0x18] sm:$0xff]
    %v1534 = vlaneseq
    %v1535 = vshrl.u32 %v1534, 7
    %v1536 = vsub.s32 0, %v1535
    %v1537 = vrot.slane %v26, %v1536
    %v1539 = vsel %vm39, %v1528, 0
    %v1542 = vsel %vm39, %v1529, 0
    %1544 = vmatprep.subr.mxu0 0.0
    %1545 = vmatpush1.msra.mxu0 %v1530
    %1546 = vmatprep.subr.mxu0 0.0
    %1547 = vmatpush1.msra.mxu0 %v1531
    %1548 = vmatprep.subr.mxu0 0.0
    %1549 = vmatpush1.msra.mxu0 %v1532
    %1550 = vmatprep.subr.mxu0 0.0
    %1551 = vmatpush1.msra.mxu0 %v1533
    %1552 = vmatprep.subr.mxu0 0.0
    %1553 = vmatpush1.msra.mxu0 0.0
    %1554 = vmatprep.subr.mxu0 0.0
    %1555 = vmatpush1.msra.mxu0 0.0
    %1556 = vmatprep.subr.mxu0 0.0
    %1557 = vmatpush1.msra.mxu0 0.0
    %1558 = vmatprep.subr.mxu0 0.0
    %1559 = vmatpush1.msra.mxu0 0.0
    %1560 = vmatprep.subr.mxu0 0.0
    %1561 = vmatpush1.msra.mxu0 0.0
    %1562 = vmatprep.subr.mxu0 0.0
    %1563 = vmatpush1.msra.mxu0 0.0
    %1564 = vmatprep.subr.mxu0 0.0
    %1565 = vmatpush1.msra.mxu0 0.0
    %1566 = vmatprep.subr.mxu0 0.0
    %1567 = vmatpush1.msra.mxu0 0.0
    %1568 = vmatprep.subr.mxu0 0.0
    %1569 = vmatpush1.msra.mxu0 0.0
    %1570 = vmatprep.subr.mxu0 0.0
    %1571 = vmatpush1.msra.mxu0 0.0
    %1572 = vmatprep.subr.mxu0 0.0
    %1573 = vmatpush1.msra.mxu0 0.0
    %1574 = vmatprep.subr.mxu0 0.0
    %1575 = vmatpush1.msra.mxu0 0.0
    %1576 = vmatprep.subr.mxu0 0.0
    %1577 = vmatpush1.msra.mxu0 0.0
    %1578 = vmatprep.subr.mxu0 0.0
    %1579 = vmatpush1.msra.mxu0 0.0
    %1580 = vmatprep.subr.mxu0 0.0
    %1581 = vmatpush1.msra.mxu0 0.0
    %1582 = vmatprep.subr.mxu0 0.0
    %1583 = vmatpush1.msra.mxu0 0.0
    %1584 = vmatprep.subr.mxu0 0.0
    %1585 = vmatpush1.msra.mxu0 0.0
    %1586 = vmatprep.subr.mxu0 0.0
    %1587 = vmatpush1.msra.mxu0 0.0
    %1588 = vmatprep.subr.mxu0 0.0
    %1589 = vmatpush1.msra.mxu0 0.0
    %1590 = vmatprep.subr.mxu0 0.0
    %1591 = vmatpush1.msra.mxu0 0.0
    %1592 = vmatprep.subr.mxu0 0.0
    %1593 = vmatpush1.msra.mxu0 0.0
    %1594 = vmatprep.subr.mxu0 0.0
    %1595 = vmatpush1.msra.mxu0 0.0
    %1596 = vmatprep.subr.mxu0 0.0
    %1597 = vmatpush1.msra.mxu0 0.0
    %1598 = vmatprep.subr.mxu0 0.0
    %1599 = vmatpush1.msra.mxu0 0.0
    %1600 = vmatprep.subr.mxu0 0.0
    %1601 = vmatpush1.msra.mxu0 0.0
    %1602 = vmatprep.subr.mxu0 0.0
    %1603 = vmatpush1.msra.mxu0 0.0
    %1604 = vmatprep.subr.mxu0 0.0
    %1605 = vmatpush1.msra.mxu0 0.0
    %1606 = vmatprep.subr.mxu0 0.0
    %1607 = vmatpush1.msra.mxu0 0.0
    %1608 = vmatprep.mubr.f32.mxu0 0.0
    %1609 = vmatmul.mubr.f32.gmra.mrb[0].mxu0 %v1539
    %v1610 = vpop.f32.mrb[0].mxu0
    %v1611 = vadd.f32 %v1537, %v1610
    %v1612 = vpop.f32.mrb[0].mxu0
    %1613 = vmatprep.mubr.f32.mxu0 0.0
    %1614 = vmatmul.mubr.f32.gmra.mrb[0].mxu0 %v1542
    %v1615 = vpop.f32.mrb[0].mxu0
    %v1616 = vadd.f32 %v1537, %v1615
    %v1617 = vpop.f32.mrb[0].mxu0
    %1618 = vdwg.mxu0
    %v1619 = vadd.f32 %v21, %v1611
    %v1620 = vadd.f32 %v22, %v1616
    %v1621 = vsel %vm39, %v1619, 0.0
    %1622 = vadd.xlane.f32.xlu0 %v1621
    %v1623 = vpop.xlane.xlu0 %1622
    %v1624 = vsel %vm39, %v1620, 0.0
    %1625 = vadd.xlane.f32.xlu0 %v1624
    %v1626 = vpop.xlane.xlu0 %1625
    %v1627 = vmul.f32 %v1623, %v46
    %v1628 = vmul.f32 %v1626, %v46
    %v1629 = vsub.f32 %v1619, %v1627
    %v1630 = vsub.f32 %v1620, %v1628
    %v1631 = vmul.f32 %v1629, %v1629
    %v1632 = vmul.f32 %v1630, %v1630
    %v1633 = vsel %vm39, %v1631, 0.0
    %1634 = vadd.xlane.f32.xlu0 %v1633
    %v1635 = vpop.xlane.xlu0 %1634
    %v1636 = vsel %vm39, %v1632, 0.0
    %1637 = vadd.xlane.f32.xlu0 %v1636
    %v1638 = vpop.xlane.xlu0 %1637
    %v1639 = vmul.f32 %v1635, %v46
    %v1640 = vmul.f32 %v1638, %v46
    %v1641 = vadd.f32 %v1639, 1e-05
    %v1642 = vadd.f32 %v1640, 1e-05
    %v1643 = vrsqrt.pop %v1641
    %v1644 = vrsqrt.pop %v1642
    %v1645 = vmul.f32 %v1629, %v1643
    %v1646 = vmul.f32 %v1630, %v1644
    %v1647 = vlaneseq
    %v1648 = vshrl.u32 %v1647, 7
    %v1649 = vsub.s32 0, %v1648
    %v1650 = vrot.slane %v27, %v1649
    %v1651 = vmul.f32 %v1645, %v1650
    %v1652 = vmul.f32 %v1646, %v1650
    %v1653 = vlaneseq
    %v1654 = vshrl.u32 %v1653, 7
    %v1655 = vsub.s32 0, %v1654
    %v1656 = vrot.slane %v28, %v1655
    %v1657 = vadd.f32 %v1651, %v1656
    %v1658 = vadd.f32 %v1652, %v1656
    %v1659 = vlaneseq
    %v1660 = vshrl.u32 %v1659, 7
    %v1661 = vsub.s32 0, %v1660
    %v1662 = vrot.slane %v29, %v1661
    %v1664 = vsel %vm39, %v1657, 0
    %v1667 = vsel %vm39, %v1658, 0
    %1669 = vmatprep.subr.mxu0 0.0
    %1670 = vmatpush1.msra.mxu0 %v35
    %1671 = vmatprep.subr.mxu0 0.0
    %1672 = vmatpush1.msra.mxu0 %v36
    %1673 = vmatprep.subr.mxu0 0.0
    %1674 = vmatpush1.msra.mxu0 %v37
    %1675 = vmatprep.subr.mxu0 0.0
    %1676 = vmatpush1.msra.mxu0 %v38
    %1677 = vmatprep.subr.mxu0 0.0
    %1678 = vmatpush1.msra.mxu0 0.0
    %1679 = vmatprep.subr.mxu0 0.0
    %1680 = vmatpush1.msra.mxu0 0.0
    %1681 = vmatprep.subr.mxu0 0.0
    %1682 = vmatpush1.msra.mxu0 0.0
    %1683 = vmatprep.subr.mxu0 0.0
    %1684 = vmatpush1.msra.mxu0 0.0
    %1685 = vmatprep.subr.mxu0 0.0
    %1686 = vmatpush1.msra.mxu0 0.0
    %1687 = vmatprep.subr.mxu0 0.0
    %1688 = vmatpush1.msra.mxu0 0.0
    %1689 = vmatprep.subr.mxu0 0.0
    %1690 = vmatpush1.msra.mxu0 0.0
    %1691 = vmatprep.subr.mxu0 0.0
    %1692 = vmatpush1.msra.mxu0 0.0
    %1693 = vmatprep.subr.mxu0 0.0
    %1694 = vmatpush1.msra.mxu0 0.0
    %1695 = vmatprep.subr.mxu0 0.0
    %1696 = vmatpush1.msra.mxu0 0.0
    %1697 = vmatprep.subr.mxu0 0.0
    %1698 = vmatpush1.msra.mxu0 0.0
    %1699 = vmatprep.subr.mxu0 0.0
    %1700 = vmatpush1.msra.mxu0 0.0
    %1701 = vmatprep.subr.mxu0 0.0
    %1702 = vmatpush1.msra.mxu0 0.0
    %1703 = vmatprep.subr.mxu0 0.0
    %1704 = vmatpush1.msra.mxu0 0.0
    %1705 = vmatprep.subr.mxu0 0.0
    %1706 = vmatpush1.msra.mxu0 0.0
    %1707 = vmatprep.subr.mxu0 0.0
    %1708 = vmatpush1.msra.mxu0 0.0
    %1709 = vmatprep.subr.mxu0 0.0
    %1710 = vmatpush1.msra.mxu0 0.0
    %1711 = vmatprep.subr.mxu0 0.0
    %1712 = vmatpush1.msra.mxu0 0.0
    %1713 = vmatprep.subr.mxu0 0.0
    %1714 = vmatpush1.msra.mxu0 0.0
    %1715 = vmatprep.subr.mxu0 0.0
    %1716 = vmatpush1.msra.mxu0 0.0
    %1717 = vmatprep.subr.mxu0 0.0
    %1718 = vmatpush1.msra.mxu0 0.0
    %1719 = vmatprep.subr.mxu0 0.0
    %1720 = vmatpush1.msra.mxu0 0.0
    %1721 = vmatprep.subr.mxu0 0.0
    %1722 = vmatpush1.msra.mxu0 0.0
    %1723 = vmatprep.subr.mxu0 0.0
    %1724 = vmatpush1.msra.mxu0 0.0
    %1725 = vmatprep.subr.mxu0 0.0
    %1726 = vmatpush1.msra.mxu0 0.0
    %1727 = vmatprep.subr.mxu0 0.0
    %1728 = vmatpush1.msra.mxu0 0.0
    %1729 = vmatprep.subr.mxu0 0.0
    %1730 = vmatpush1.msra.mxu0 0.0
    %1731 = vmatprep.subr.mxu0 0.0
    %1732 = vmatpush1.msra.mxu0 0.0
    %1733 = vmatprep.mubr.f32.mxu0 0.0
    %1734 = vmatmul.mubr.f32.gmra.mrb[0].mxu0 %v1664
    %v1735 = vpop.f32.mrb[0].mxu0
    %v1736 = vadd.f32 %v1662, %v1735
    %v1737 = vpop.f32.mrb[0].mxu0
    %1738 = vmatprep.mubr.f32.mxu0 0.0
    %1739 = vmatmul.mubr.f32.gmra.mrb[0].mxu0 %v1667
    %v1740 = vpop.f32.mrb[0].mxu0
    %v1741 = vadd.f32 %v1662, %v1740
    %v1742 = vpop.f32.mrb[0].mxu0
    %1743 = vdwg.mxu0
    %v1744 = vmul.f32 %v1736, 0.5
    %v1745 = vmul.f32 %v1741, 0.5
    %v1746 = vmul.f32 %v1736, 0.044715
    %v1747 = vmul.f32 %v1741, 0.044715
    %v1748 = vmul.f32 %v1746, %v1736
    %v1749 = vmul.f32 %v1747, %v1741
    %v1750 = vmul.f32 %v1748, %v1736
    %v1751 = vmul.f32 %v1749, %v1741
    %v1752 = vadd.f32 %v1736, %v1750
    %v1753 = vadd.f32 %v1741, %v1751
    %v1754 = vmul.f32 %v1752, 0.7978846
    %v1755 = vmul.f32 %v1753, 0.7978846
    %v1756 = vtanh.pop %v1754
    %v1757 = vtanh.pop %v1755
    %v1758 = vadd.f32 %v1756, 1.0
    %v1759 = vadd.f32 %v1757, 1.0
    %v1760 = vmul.f32 %v1744, %v1758
    %v1761 = vmul.f32 %v1745, %v1759
    %v1762 = vld [vmem:[%s3] sm:$0xff]
    %v1763 = vld [vmem:[%s3 + $0x8] sm:$0xff]
    %v1764 = vld [vmem:[%s3 + $0x10] sm:$0xff]
    %v1765 = vld [vmem:[%s3 + $0x18] sm:$0xff]
    %v1766 = vld [vmem:[%s3 + $0x20] sm:$0xff]
    %v1767 = vld [vmem:[%s3 + $0x28] sm:$0xff]
    %v1768 = vld [vmem:[%s3 + $0x30] sm:$0xff]
    %v1769 = vld [vmem:[%s3 + $0x38] sm:$0xff]
    %v1770 = vld [vmem:[%s3 + $0x40] sm:$0xff]
    %v1771 = vld [vmem:[%s3 + $0x48] sm:$0xff]
    %v1772 = vld [vmem:[%s3 + $0x50] sm:$0xff]
    %v1773 = vld [vmem:[%s3 + $0x58] sm:$0xff]
    %v1774 = vld [vmem:[%s3 + $0x60] sm:$0xff]
    %v1775 = vld [vmem:[%s3 + $0x68] sm:$0xff]
    %v1776 = vld [vmem:[%s3 + $0x70] sm:$0xff]
    %v1777 = vld [vmem:[%s3 + $0x78] sm:$0xff]
    %v1778 = vlaneseq
    %v1779 = vshrl.u32 %v1778, 7
    %v1780 = vsub.s32 0, %v1779
    %v1781 = vrot.slane %v30, %v1780
    %1782 = vmatprep.subr.mxu0 0.0
    %1783 = vmatpush1.msra.mxu0 %v1762
    %1784 = vmatprep.subr.mxu0 0.0
    %1785 = vmatpush1.msra.mxu0 %v1763
    %1786 = vmatprep.subr.mxu0 0.0
    %1787 = vmatpush1.msra.mxu0 %v1764
    %1788 = vmatprep.subr.mxu0 0.0
    %1789 = vmatpush1.msra.mxu0 %v1765
    %1790 = vmatprep.subr.mxu0 0.0
    %1791 = vmatpush1.msra.mxu0 %v1766
    %1792 = vmatprep.subr.mxu0 0.0
    %1793 = vmatpush1.msra.mxu0 %v1767
    %1794 = vmatprep.subr.mxu0 0.0
    %1795 = vmatpush1.msra.mxu0 %v1768
    %1796 = vmatprep.subr.mxu0 0.0
    %1797 = vmatpush1.msra.mxu0 %v1769
    %1798 = vmatprep.subr.mxu0 0.0
    %1799 = vmatpush1.msra.mxu0 %v1770
    %1800 = vmatprep.subr.mxu0 0.0
    %1801 = vmatpush1.msra.mxu0 %v1771
    %1802 = vmatprep.subr.mxu0 0.0
    %1803 = vmatpush1.msra.mxu0 %v1772
    %1804 = vmatprep.subr.mxu0 0.0
    %1805 = vmatpush1.msra.mxu0 %v1773
    %1806 = vmatprep.subr.mxu0 0.0
    %1807 = vmatpush1.msra.mxu0 %v1774
    %1808 = vmatprep.subr.mxu0 0.0
    %1809 = vmatpush1.msra.mxu0 %v1775
    %1810 = vmatprep.subr.mxu0 0.0
    %1811 = vmatpush1.msra.mxu0 %v1776
    %1812 = vmatprep.subr.mxu0 0.0
    %1813 = vmatpush1.msra.mxu0 %v1777
    %1814 = vmatprep.subr.mxu0 0.0
    %1815 = vmatpush1.msra.mxu0 0.0
    %1816 = vmatprep.subr.mxu0 0.0
    %1817 = vmatpush1.msra.mxu0 0.0
    %1818 = vmatprep.subr.mxu0 0.0
    %1819 = vmatpush1.msra.mxu0 0.0
    %1820 = vmatprep.subr.mxu0 0.0
    %1821 = vmatpush1.msra.mxu0 0.0
    %1822 = vmatprep.subr.mxu0 0.0
    %1823 = vmatpush1.msra.mxu0 0.0
    %1824 = vmatprep.subr.mxu0 0.0
    %1825 = vmatpush1.msra.mxu0 0.0
    %1826 = vmatprep.subr.mxu0 0.0
    %1827 = vmatpush1.msra.mxu0 0.0
    %1828 = vmatprep.subr.mxu0 0.0
    %1829 = vmatpush1.msra.mxu0 0.0
    %1830 = vmatprep.subr.mxu0 0.0
    %1831 = vmatpush1.msra.mxu0 0.0
    %1832 = vmatprep.subr.mxu0 0.0
    %1833 = vmatpush1.msra.mxu0 0.0
    %1834 = vmatprep.subr.mxu0 0.0
    %1835 = vmatpush1.msra.mxu0 0.0
    %1836 = vmatprep.subr.mxu0 0.0
    %1837 = vmatpush1.msra.mxu0 0.0
    %1838 = vmatprep.subr.mxu0 0.0
    %1839 = vmatpush1.msra.mxu0 0.0
    %1840 = vmatprep.subr.mxu0 0.0
    %1841 = vmatpush1.msra.mxu0 0.0
    %1842 = vmatprep.subr.mxu0 0.0
    %1843 = vmatpush1.msra.mxu0 0.0
    %1844 = vmatprep.subr.mxu0 0.0
    %1845 = vmatpush1.msra.mxu0 0.0
    %1846 = vmatprep.mubr.f32.mxu0 0.0
    %1847 = vmatmul.mubr.f32.gmra.mrb[0].mxu0 %v1760
    %v1848 = vpop.f32.mrb[0].mxu0
    %v1849 = vadd.f32 %v1781, %v1848
    %v1850 = vpop.f32.mrb[0].mxu0
    %1851 = vmatprep.mubr.f32.mxu0 0.0
    %1852 = vmatmul.mubr.f32.gmra.mrb[0].mxu0 %v1761
    %v1853 = vpop.f32.mrb[0].mxu0
    %v1854 = vadd.f32 %v1781, %v1853
    %v1855 = vpop.f32.mrb[0].mxu0
    %1856 = vdwg.mxu0
    %v1857 = vadd.f32 %v1619, %v1849
    %v1858 = vadd.f32 %v1620, %v1854
    %1859 = vst.msk [vmem:[#allocation2] sm:$0xff] %vm39, %v1857
    %1860 = vst.msk [vmem:[#allocation2 + $0x8] sm:$0xff] %vm39, %v1858
    // Predicated region
    $region22: #{tpu_custom_call.1} parent=1 // pred_check
      _
    $region23: #{tpu_custom_call.1} parent=1 // pred_check_branch
      %1862 = sbr.rel (0) target = $region25
    $region24: #{tpu_custom_call.1} parent=1 // pred_region
      %s1864 = ssub.s32 256, 256
      %1865 = vsyncadd [#allocation3], %s1864
      %s1866 = sshll.u32 [#allocation2], 4
      %s1867 = int_to_ptr.vmem [resolvable:$true] %s1866
      %1872 = dma.vmem_to_hbm [thread:$0]  %s1867, 256, %s5, [#allocation3], 128, 128, 8
    $region25: #{tpu_custom_call.1} parent=1 // pred_fallthru
      _
    // Predicated region
    $region26: #{tpu_custom_call.1} parent=1 // pred_check
      _
    $region27: #{tpu_custom_call.1} parent=1 // pred_check_branch
      %1874 = sbr.rel (0) target = $region29
    $region28: #{tpu_custom_call.1} parent=1 // pred_region
      %1875 = dma.done [#allocation3], 256
    $region29: #{tpu_custom_call.1} parent=1 // pred_fallthru
      _
    %1876 = vsyncpa [#allocation3], 1

</llo_original>
